<compile_context>
chip_gen: v7x
topology: tpu7x:2x2x1
jax: 0.10.0
libtpu: 0.0.40
codegen_flags: <defaults>
</compile_context>

<pallas_src>
import functools

import jax
import jax.numpy as jnp
from jax import lax
from jax.experimental import pallas as pl
from jax.experimental.pallas import tpu as pltpu


def _linear_attention_kernel(eps, multi_head,
                             q_ref, k_ref, v_ref, wqkv_ref, bqkv_ref, *rest):
    if multi_head:
        mask_ref, wo_ref, bo_ref, o_ref = rest
    else:
        (o_ref,) = rest

    bb, N, D = q_ref.shape
    M = bb * N
    mm2 = (((1,), (0,)), ((), ()))       # standard (rows, D) @ (D, cols)
    bmm = (((2,), (1,)), ((0,), (0,)))   # batched standard matmul, batch dim 0

    # Fused QKV projection.  Inputs stay in their storage dtype on the MXU
    # (bf16 inputs -> bf16 matmul), accumulation is f32; the packed weight is
    # already in (in, out) layout so no in-kernel transpose is needed.
    qp = lax.dot_general(q_ref[...].reshape(M, D), wqkv_ref[0], mm2,
                         preferred_element_type=jnp.float32) + bqkv_ref[0]
    kp = lax.dot_general(k_ref[...].reshape(M, D), wqkv_ref[1], mm2,
                         preferred_element_type=jnp.float32) + bqkv_ref[1]
    vp = lax.dot_general(v_ref[...].reshape(M, D), wqkv_ref[2], mm2,
                         preferred_element_type=jnp.float32) + bqkv_ref[2]

    # elu(x) + 1 feature map, in f32.
    qf = jnp.where(qp > 0, qp + 1.0, jnp.exp(qp))
    kf = jnp.where(kp > 0, kp + 1.0, jnp.exp(kp))

    qf3 = qf.reshape(bb, N, D)
    kf3 = kf.reshape(bb, N, D)
    vp3 = vp.reshape(bb, N, D)

    # kv[b, dk, m] = sum_s kf[b, s, dk] * v[b, s, m] for ALL (dk, m) pairs; the
    # block-diagonal head mask below zeroes cross-head terms.  With head_dim
    # well below 128 this dense form keeps the MXU lane-dense instead of
    # issuing n_heads degenerate (N, d) x (d, d) matmuls, and it removes every
    # per-head slice / concatenate.
    kv = lax.dot_general(jnp.swapaxes(kf3, 1, 2), vp3, bmm,
                         preferred_element_type=jnp.float32)        # (bb, D, D)

    ksum = jnp.sum(kf3, axis=1, keepdims=True)                       # (bb, 1, D)
    qk = (qf3 * ksum).reshape(M, D)

    if multi_head:
        mask = mask_ref[...]                                         # (D, D) 0/1
        kv = kv * mask[None]
        # den[l, m] = sum_{dk in head(m)} qf[l, dk] * ksum[dk]
        den = lax.dot_general(qk, mask, mm2,
                              preferred_element_type=jnp.float32)    # (M, D)
    else:
        den = jnp.sum(qk, axis=-1, keepdims=True)                    # (M, 1)

    num = lax.dot_general(qf3, kv, bmm,
                          preferred_element_type=jnp.float32).reshape(M, D)
    out = num * pl.reciprocal(den + eps, approx=True)

    if multi_head:
        out = lax.dot_general(out.astype(wo_ref.dtype), wo_ref[...], mm2,
                              preferred_element_type=jnp.float32) + bo_ref[...]

    # TODO(synk): dropout is identity in eval mode; no stochastic dropout applied.
    o_ref[...] = out.reshape(bb, N, D).astype(o_ref.dtype)


def linear_attention(q, k, v, params, *, n_heads, eps, block_b=None):
    B, N, D = q.shape
    assert D % n_heads == 0
    head_dim = D // n_heads
    multi_head = n_heads != 1
    wq, bq, wk, bk, wv, bv, wo, bo = params

    # Fuse + pre-transpose the projection weights into a single (3, D, D)
    # tensor in (in, out) layout, so the kernel does no weight transposes and
    # loads one packed weight block.
    wqkv = jnp.stack([wq.T, wk.T, wv.T], axis=0).astype(q.dtype)
    bqkv = jnp.stack([bq, bk, bv], axis=0).reshape(3, 1, D).astype(jnp.float32)

    if multi_head:
        lane_head = jnp.arange(D) // head_dim
        head_mask = (lane_head[:, None] == lane_head[None, :]).astype(jnp.float32)
        wo_t = wo.T.astype(jnp.float32)
        bo2 = bo.reshape(1, D).astype(jnp.float32)

    # Fold batch elements per grid step: fills the MXU M dimension and
    # amortizes per-step overhead while keeping the streamed working set
    # (q, k, v, out double-buffered) within a conservative VMEM budget.
    # TODO(synk): for very large N, add an N-tile grid axis with a two-pass
    # kv/ksum accumulation (pl.when init) so the working set stays in VMEM.
    if block_b is None:
        block_b = max(1, min(B, 512 // max(N, 1)))
        itemsize = jnp.dtype(q.dtype).itemsize
        while block_b > 1 and 8 * block_b * N * D * itemsize > 24 * 1024 * 1024:
            block_b -= 1
    while B % block_b:
        block_b -= 1

    vec_spec = pl.BlockSpec((block_b, N, D), lambda b: (b, 0, 0))

    def const_spec(shape, pipeline_mode):
        idx = lambda b: (0,) * len(shape)
        if pipeline_mode is None:
            return pl.BlockSpec(shape, idx)
        return pl.BlockSpec(shape, idx, pipeline_mode=pipeline_mode)

    kernel = functools.partial(_linear_attention_kernel, eps, multi_head)

    def run(weight_mode):
        in_specs = [vec_spec, vec_spec, vec_spec,
                    const_spec((3, D, D), weight_mode),
                    const_spec((3, 1, D), weight_mode)]
        inputs = [q, k, v, wqkv, bqkv]
        if multi_head:
            in_specs += [const_spec((D, D), weight_mode),
                         const_spec((D, D), weight_mode),
                         const_spec((1, D), weight_mode)]
            inputs += [head_mask, wo_t, bo2]
        fn = pl.pallas_call(
            kernel,
            out_shape=jax.ShapeDtypeStruct((B, N, D), q.dtype),
            grid_spec=pltpu.PrefetchScalarGridSpec(
                num_scalar_prefetch=0,
                grid=(B // block_b,),
                in_specs=in_specs,
                out_specs=vec_spec,
            ),
            compiler_params=pltpu.CompilerParams(
                dimension_semantics=("parallel",),
                vmem_limit_bytes=64 * 1024 * 1024,
            ),
        )
        return fn(*inputs)

    try:
        # Constant-index weights / bias / mask only need a single VMEM buffer.
        return run(pl.Buffered(1))
    except Exception:  # pragma: no cover - fall back if single-buffering is unsupported
        return run(None)


def init_params(key, d_hidden):
    """Deterministic parameter init mirroring the PyTorch module shapes."""
    ks = jax.random.split(key, 8)
    xav = (6.0 / (d_hidden + d_hidden)) ** 0.5          # xavier_uniform_ bound
    bb = 1.0 / (d_hidden ** 0.5)                        # torch Linear default bound
    wq = jax.random.uniform(ks[0], (d_hidden, d_hidden), jnp.float32, -xav, xav)
    wk = jax.random.uniform(ks[1], (d_hidden, d_hidden), jnp.float32, -xav, xav)
    wv = jax.random.uniform(ks[2], (d_hidden, d_hidden), jnp.float32, -xav, xav)
    bq = jax.random.uniform(ks[3], (d_hidden,), jnp.float32, -bb, bb)
    bk = jax.random.uniform(ks[4], (d_hidden,), jnp.float32, -bb, bb)
    bv = jax.random.uniform(ks[5], (d_hidden,), jnp.float32, -bb, bb)
    wo = jax.random.uniform(ks[6], (d_hidden, d_hidden), jnp.float32, -bb, bb)
    bo = jax.random.uniform(ks[7], (d_hidden,), jnp.float32, -bb, bb)
    return (wq, bq, wk, bk, wv, bv, wo, bo)


def reference(q, k, v, params, *, n_heads, eps):
    """Pure-JAX reproduction of the PyTorch forward (eval mode)."""
    wq, bq, wk, bk, wv, bv, wo, bo = params
    B, N, D = q.shape
    d = D // n_heads
    qp = (q @ wq.T + bq).reshape(B, N, n_heads, d)
    kp = (k @ wk.T + bk).reshape(B, N, n_heads, d)
    vp = (v @ wv.T + bv).reshape(B, N, n_heads, d)
    qf = jnp.where(qp > 0, qp + 1.0, jnp.exp(qp))
    kf = jnp.where(kp > 0, kp + 1.0, jnp.exp(kp))
    kv = jnp.einsum('nshd,nshm->nhmd', kf, vp)
    z = 1.0 / (jnp.einsum('nlhd,nhd->nlh', qf, kf.sum(axis=1)) + eps)
    out = jnp.einsum('nlhd,nhmd,nlh->nlhm', qf, kv, z).reshape(B, N, D)
    if n_heads != 1:
        out = out @ wo.T + bo
    return out


if __name__ == "__main__":
    B, N, D_HIDDEN, N_HEADS = 2, 16, 32, 4
    EPS = 1e-6

    root = jax.random.PRNGKey(0)
    kq, kk, kv_, kp = jax.random.split(root, 4)
    q = jax.random.normal(kq, (B, N, D_HIDDEN), jnp.float32)
    k = jax.random.normal(kk, (B, N, D_HIDDEN), jnp.float32)
    v = jax.random.normal(kv_, (B, N, D_HIDDEN), jnp.float32)
    params = init_params(kp, D_HIDDEN)

    # Multi-head path (with output projection).
    out = jax.block_until_ready(
        linear_attention(q, k, v, params, n_heads=N_HEADS, eps=EPS))
    ref = reference(q, k, v, params, n_heads=N_HEADS, eps=EPS)
    assert out.shape == (B, N, D_HIDDEN)
    assert jnp.allclose(out, ref, rtol=2e-3, atol=2e-3), \
        f"max abs err = {float(jnp.max(jnp.abs(out - ref)))}"

    # Single-head path (no output projection, no head mask).
    out1 = jax.block_until_ready(
        linear_attention(q, k, v, params, n_heads=1, eps=EPS))
    ref1 = reference(q, k, v, params, n_heads=1, eps=EPS)
    assert jnp.allclose(out1, ref1, rtol=2e-3, atol=2e-3), \
        f"max abs err = {float(jnp.max(jnp.abs(out1 - ref1)))}"

    print("KERNEL_OK")
</pallas_src>

<mosaic_0001>
module attributes {stable_mosaic.version = 11 : i64} {
  func.func @_linear_attention_kernel(%arg0: i32, %arg1: memref<2x16x32xf32, #tpu.memory_space<vmem>>, %arg2: memref<2x16x32xf32, #tpu.memory_space<vmem>>, %arg3: memref<2x16x32xf32, #tpu.memory_space<vmem>>, %arg4: memref<3x32x32xf32, #tpu.memory_space<vmem>>, %arg5: memref<3x1x32xf32, #tpu.memory_space<vmem>>, %arg6: memref<32x32xf32, #tpu.memory_space<vmem>>, %arg7: memref<32x32xf32, #tpu.memory_space<vmem>>, %arg8: memref<1x32xf32, #tpu.memory_space<vmem>>, %arg9: memref<2x16x32xf32, #tpu.memory_space<vmem>>) attributes {dimension_semantics = [#tpu.dimension_semantics<parallel>], iteration_bounds = array<i64: 1>, scalar_prefetch = 0 : i64, scratch_operands = 0 : i64, tpu.core_type = #tpu.core_type<tc>, window_params = [{transform_indices = @transform_0, window_bounds = array<i64: 2, 16, 32>}, {transform_indices = @transform_1, window_bounds = array<i64: 2, 16, 32>}, {transform_indices = @transform_2, window_bounds = array<i64: 2, 16, 32>}, {pipeline_mode = #tpu.pipeline_mode<synchronous>, transform_indices = @transform_3, window_bounds = array<i64: 3, 32, 32>}, {pipeline_mode = #tpu.pipeline_mode<synchronous>, transform_indices = @transform_4, window_bounds = array<i64: 3, 1, 32>}, {pipeline_mode = #tpu.pipeline_mode<synchronous>, transform_indices = @transform_5, window_bounds = array<i64: 32, 32>}, {pipeline_mode = #tpu.pipeline_mode<synchronous>, transform_indices = @transform_6, window_bounds = array<i64: 32, 32>}, {pipeline_mode = #tpu.pipeline_mode<synchronous>, transform_indices = @transform_7, window_bounds = array<i64: 1, 32>}, {transform_indices = @transform_8, window_bounds = array<i64: 2, 16, 32>}]} {
    %c0 = arith.constant 0 : index
    %c0_0 = arith.constant 0 : index
    %c0_1 = arith.constant 0 : index
    %0 = vector.load %arg1[%c0, %c0_0, %c0_1] : memref<2x16x32xf32, #tpu.memory_space<vmem>>, vector<2x16x32xf32>
    %1 = vector.shape_cast %0 : vector<2x16x32xf32> to vector<32x32xf32>
    %c0_2 = arith.constant 0 : index
    %c0_3 = arith.constant 0 : index
    %c0_4 = arith.constant 0 : index
    %2 = vector.load %arg4[%c0_2, %c0_3, %c0_4] : memref<3x32x32xf32, #tpu.memory_space<vmem>>, vector<1x32x32xf32>
    %3 = vector.shape_cast %2 : vector<1x32x32xf32> to vector<32x32xf32>
    %cst = arith.constant dense<0.000000e+00> : vector<32x32xf32>
    %4 = tpu.matmul %1, %3, %cst {dimension_numbers = #tpu.dot_dimension_numbers<[1], [0], [0], [1], [0, 0, 1, 1], [], []>} : vector<32x32xf32>, vector<32x32xf32>, vector<32x32xf32> -> vector<32x32xf32>
    %c0_5 = arith.constant 0 : index
    %c0_6 = arith.constant 0 : index
    %c0_7 = arith.constant 0 : index
    %5 = vector.load %arg5[%c0_5, %c0_6, %c0_7] : memref<3x1x32xf32, #tpu.memory_space<vmem>>, vector<1x1x32xf32>
    %6 = vector.shape_cast %5 : vector<1x1x32xf32> to vector<1x32xf32>
    %7 = vector.broadcast %6 : vector<1x32xf32> to vector<32x32xf32>
    %8 = arith.addf %4, %7 : vector<32x32xf32>
    %c0_8 = arith.constant 0 : index
    %c0_9 = arith.constant 0 : index
    %c0_10 = arith.constant 0 : index
    %9 = vector.load %arg2[%c0_8, %c0_9, %c0_10] : memref<2x16x32xf32, #tpu.memory_space<vmem>>, vector<2x16x32xf32>
    %10 = vector.shape_cast %9 : vector<2x16x32xf32> to vector<32x32xf32>
    %c1 = arith.constant 1 : index
    %c0_11 = arith.constant 0 : index
    %c0_12 = arith.constant 0 : index
    %11 = vector.load %arg4[%c1, %c0_11, %c0_12] : memref<3x32x32xf32, #tpu.memory_space<vmem>>, vector<1x32x32xf32>
    %12 = vector.shape_cast %11 : vector<1x32x32xf32> to vector<32x32xf32>
    %cst_13 = arith.constant dense<0.000000e+00> : vector<32x32xf32>
    %13 = tpu.matmul %10, %12, %cst_13 {dimension_numbers = #tpu.dot_dimension_numbers<[1], [0], [0], [1], [0, 0, 1, 1], [], []>} : vector<32x32xf32>, vector<32x32xf32>, vector<32x32xf32> -> vector<32x32xf32>
    %c1_14 = arith.constant 1 : index
    %c0_15 = arith.constant 0 : index
    %c0_16 = arith.constant 0 : index
    %14 = vector.load %arg5[%c1_14, %c0_15, %c0_16] : memref<3x1x32xf32, #tpu.memory_space<vmem>>, vector<1x1x32xf32>
    %15 = vector.shape_cast %14 : vector<1x1x32xf32> to vector<1x32xf32>
    %16 = vector.broadcast %15 : vector<1x32xf32> to vector<32x32xf32>
    %17 = arith.addf %13, %16 : vector<32x32xf32>
    %c0_17 = arith.constant 0 : index
    %c0_18 = arith.constant 0 : index
    %c0_19 = arith.constant 0 : index
    %18 = vector.load %arg3[%c0_17, %c0_18, %c0_19] : memref<2x16x32xf32, #tpu.memory_space<vmem>>, vector<2x16x32xf32>
    %19 = vector.shape_cast %18 : vector<2x16x32xf32> to vector<32x32xf32>
    %c2 = arith.constant 2 : index
    %c0_20 = arith.constant 0 : index
    %c0_21 = arith.constant 0 : index
    %20 = vector.load %arg4[%c2, %c0_20, %c0_21] : memref<3x32x32xf32, #tpu.memory_space<vmem>>, vector<1x32x32xf32>
    %21 = vector.shape_cast %20 : vector<1x32x32xf32> to vector<32x32xf32>
    %cst_22 = arith.constant dense<0.000000e+00> : vector<32x32xf32>
    %22 = tpu.matmul %19, %21, %cst_22 {dimension_numbers = #tpu.dot_dimension_numbers<[1], [0], [0], [1], [0, 0, 1, 1], [], []>} : vector<32x32xf32>, vector<32x32xf32>, vector<32x32xf32> -> vector<32x32xf32>
    %c2_23 = arith.constant 2 : index
    %c0_24 = arith.constant 0 : index
    %c0_25 = arith.constant 0 : index
    %23 = vector.load %arg5[%c2_23, %c0_24, %c0_25] : memref<3x1x32xf32, #tpu.memory_space<vmem>>, vector<1x1x32xf32>
    %24 = vector.shape_cast %23 : vector<1x1x32xf32> to vector<1x32xf32>
    %25 = vector.broadcast %24 : vector<1x32xf32> to vector<32x32xf32>
    %26 = arith.addf %22, %25 : vector<32x32xf32>
    %cst_26 = arith.constant 0.000000e+00 : f32
    %27 = vector.broadcast %cst_26 : f32 to vector<32x32xf32>
    %28 = arith.cmpf ogt, %8, %27 : vector<32x32xf32>
    %cst_27 = arith.constant 1.000000e+00 : f32
    %29 = vector.broadcast %cst_27 : f32 to vector<32x32xf32>
    %30 = arith.addf %8, %29 : vector<32x32xf32>
    %31 = math.exp %8 : vector<32x32xf32>
    %32 = arith.select %28, %30, %31 : vector<32x32xi1>, vector<32x32xf32>
    %cst_28 = arith.constant 0.000000e+00 : f32
    %33 = vector.broadcast %cst_28 : f32 to vector<32x32xf32>
    %34 = arith.cmpf ogt, %17, %33 : vector<32x32xf32>
    %cst_29 = arith.constant 1.000000e+00 : f32
    %35 = vector.broadcast %cst_29 : f32 to vector<32x32xf32>
    %36 = arith.addf %17, %35 : vector<32x32xf32>
    %37 = math.exp %17 : vector<32x32xf32>
    %38 = arith.select %34, %36, %37 : vector<32x32xi1>, vector<32x32xf32>
    %39 = vector.shape_cast %32 : vector<32x32xf32> to vector<2x16x32xf32>
    %40 = vector.shape_cast %38 : vector<32x32xf32> to vector<2x16x32xf32>
    %41 = vector.shape_cast %26 : vector<32x32xf32> to vector<2x16x32xf32>
    %42 = tpu.transpose %40, [0, 2, 1] : vector<2x16x32xf32> -> vector<2x32x16xf32>
    %cst_30 = arith.constant dense<0.000000e+00> : vector<2x32x32xf32>
    %43 = tpu.matmul %42, %41, %cst_30 {dimension_numbers = #tpu.dot_dimension_numbers<[2], [1], [1], [2], [0, 0, 0, 1, 1, 2], [0], [0]>} : vector<2x32x16xf32>, vector<2x16x32xf32>, vector<2x32x32xf32> -> vector<2x32x32xf32>
    %cst_31 = arith.constant dense<0.000000e+00> : vector<2x32xf32>
    %44 = vector.multi_reduction <add>, %40, %cst_31 [1] : vector<2x16x32xf32> to vector<2x32xf32>
    %45 = vector.shape_cast %44 : vector<2x32xf32> to vector<2x1x32xf32>
    %46 = vector.broadcast %45 : vector<2x1x32xf32> to vector<2x16x32xf32>
    %47 = arith.mulf %39, %46 : vector<2x16x32xf32>
    %48 = vector.shape_cast %47 : vector<2x16x32xf32> to vector<32x32xf32>
    %c0_32 = arith.constant 0 : index
    %c0_33 = arith.constant 0 : index
    %49 = vector.load %arg6[%c0_32, %c0_33] : memref<32x32xf32, #tpu.memory_space<vmem>>, vector<32x32xf32>
    %50 = vector.shape_cast %49 : vector<32x32xf32> to vector<1x32x32xf32>
    %51 = vector.broadcast %50 : vector<1x32x32xf32> to vector<2x32x32xf32>
    %52 = arith.mulf %43, %51 : vector<2x32x32xf32>
    %cst_34 = arith.constant dense<0.000000e+00> : vector<32x32xf32>
    %53 = tpu.matmul %48, %49, %cst_34 {dimension_numbers = #tpu.dot_dimension_numbers<[1], [0], [0], [1], [0, 0, 1, 1], [], []>} : vector<32x32xf32>, vector<32x32xf32>, vector<32x32xf32> -> vector<32x32xf32>
    %cst_35 = arith.constant dense<0.000000e+00> : vector<2x16x32xf32>
    %54 = tpu.matmul %39, %52, %cst_35 {dimension_numbers = #tpu.dot_dimension_numbers<[2], [1], [1], [2], [0, 0, 0, 1, 1, 2], [0], [0]>} : vector<2x16x32xf32>, vector<2x32x32xf32>, vector<2x16x32xf32> -> vector<2x16x32xf32>
    %55 = vector.shape_cast %54 : vector<2x16x32xf32> to vector<32x32xf32>
    %cst_36 = arith.constant 9.99999997E-7 : f32
    %56 = vector.broadcast %cst_36 : f32 to vector<32x32xf32>
    %57 = arith.addf %53, %56 : vector<32x32xf32>
    %58 = tpu.reciprocal %57 {approx = true} : vector<32x32xf32> -> vector<32x32xf32>
    %59 = arith.mulf %55, %58 : vector<32x32xf32>
    %c0_37 = arith.constant 0 : index
    %c0_38 = arith.constant 0 : index
    %60 = vector.load %arg7[%c0_37, %c0_38] : memref<32x32xf32, #tpu.memory_space<vmem>>, vector<32x32xf32>
    %cst_39 = arith.constant dense<0.000000e+00> : vector<32x32xf32>
    %61 = tpu.matmul %59, %60, %cst_39 {dimension_numbers = #tpu.dot_dimension_numbers<[1], [0], [0], [1], [0, 0, 1, 1], [], []>} : vector<32x32xf32>, vector<32x32xf32>, vector<32x32xf32> -> vector<32x32xf32>
    %c0_40 = arith.constant 0 : index
    %c0_41 = arith.constant 0 : index
    %62 = vector.load %arg8[%c0_40, %c0_41] : memref<1x32xf32, #tpu.memory_space<vmem>>, vector<1x32xf32>
    %63 = vector.broadcast %62 : vector<1x32xf32> to vector<32x32xf32>
    %64 = arith.addf %61, %63 : vector<32x32xf32>
    %65 = vector.shape_cast %64 : vector<32x32xf32> to vector<2x16x32xf32>
    %c0_42 = arith.constant 0 : index
    %c0_43 = arith.constant 0 : index
    %c0_44 = arith.constant 0 : index
    %66 = vector.load %arg9[%c0_42, %c0_43, %c0_44] : memref<2x16x32xf32, #tpu.memory_space<vmem>>, vector<2x16x32xf32>
    tpu.vector_store %arg9[%c0_42, %c0_43, %c0_44], %65 {strides = array<i32>} : memref<2x16x32xf32, #tpu.memory_space<vmem>>, vector<2x16x32xf32>,
    return
  }
  func.func @transform_0(%arg0: i32) -> (i32, i32, i32) {
    %c0_i32 = arith.constant 0 : i32
    %c0_i32_0 = arith.constant 0 : i32
    %c0_i32_1 = arith.constant 0 : i32
    return %arg0, %c0_i32, %c0_i32_0 : i32, i32, i32
  }
  func.func @transform_1(%arg0: i32) -> (i32, i32, i32) {
    %c0_i32 = arith.constant 0 : i32
    %c0_i32_0 = arith.constant 0 : i32
    %c0_i32_1 = arith.constant 0 : i32
    return %arg0, %c0_i32, %c0_i32_0 : i32, i32, i32
  }
  func.func @transform_2(%arg0: i32) -> (i32, i32, i32) {
    %c0_i32 = arith.constant 0 : i32
    %c0_i32_0 = arith.constant 0 : i32
    %c0_i32_1 = arith.constant 0 : i32
    return %arg0, %c0_i32, %c0_i32_0 : i32, i32, i32
  }
  func.func @transform_3(%arg0: i32) -> (i32, i32, i32) {
    %c0_i32 = arith.constant 0 : i32
    %c0_i32_0 = arith.constant 0 : i32
    %c0_i32_1 = arith.constant 0 : i32
    %c0_i32_2 = arith.constant 0 : i32
    return %c0_i32, %c0_i32_0, %c0_i32_1 : i32, i32, i32
  }
  func.func @transform_4(%arg0: i32) -> (i32, i32, i32) {
    %c0_i32 = arith.constant 0 : i32
    %c0_i32_0 = arith.constant 0 : i32
    %c0_i32_1 = arith.constant 0 : i32
    %c0_i32_2 = arith.constant 0 : i32
    return %c0_i32, %c0_i32_0, %c0_i32_1 : i32, i32, i32
  }
  func.func @transform_5(%arg0: i32) -> (i32, i32) {
    %c0_i32 = arith.constant 0 : i32
    %c0_i32_0 = arith.constant 0 : i32
    %c0_i32_1 = arith.constant 0 : i32
    return %c0_i32, %c0_i32_0 : i32, i32
  }
  func.func @transform_6(%arg0: i32) -> (i32, i32) {
    %c0_i32 = arith.constant 0 : i32
    %c0_i32_0 = arith.constant 0 : i32
    %c0_i32_1 = arith.constant 0 : i32
    return %c0_i32, %c0_i32_0 : i32, i32
  }
  func.func @transform_7(%arg0: i32) -> (i32, i32) {
    %c0_i32 = arith.constant 0 : i32
    %c0_i32_0 = arith.constant 0 : i32
    %c0_i32_1 = arith.constant 0 : i32
    return %c0_i32, %c0_i32_0 : i32, i32
  }
  func.func @transform_8(%arg0: i32) -> (i32, i32, i32) {
    %c0_i32 = arith.constant 0 : i32
    %c0_i32_0 = arith.constant 0 : i32
    %c0_i32_1 = arith.constant 0 : i32
    return %arg0, %c0_i32, %c0_i32_0 : i32, i32, i32
  }
}

module attributes {stable_mosaic.version = 11 : i64} {
  func.func @_linear_attention_kernel(%arg0: i32, %arg1: memref<2x16x32xf32, #tpu.memory_space<vmem>>, %arg2: memref<2x16x32xf32, #tpu.memory_space<vmem>>, %arg3: memref<2x16x32xf32, #tpu.memory_space<vmem>>, %arg4: memref<3x32x32xf32, #tpu.memory_space<vmem>>, %arg5: memref<3x1x32xf32, #tpu.memory_space<vmem>>, %arg6: memref<32x32xf32, #tpu.memory_space<vmem>>, %arg7: memref<32x32xf32, #tpu.memory_space<vmem>>, %arg8: memref<1x32xf32, #tpu.memory_space<vmem>>, %arg9: memref<2x16x32xf32, #tpu.memory_space<vmem>>) attributes {dimension_semantics = [#tpu.dimension_semantics<parallel>], iteration_bounds = array<i64: 1>, scalar_prefetch = 0 : i64, scratch_operands = 0 : i64, tpu.core_type = #tpu.core_type<tc>, window_params = [{transform_indices = @transform_0, window_bounds = array<i64: 2, 16, 32>}, {transform_indices = @transform_1, window_bounds = array<i64: 2, 16, 32>}, {transform_indices = @transform_2, window_bounds = array<i64: 2, 16, 32>}, {pipeline_mode = #tpu.pipeline_mode<synchronous>, transform_indices = @transform_3, window_bounds = array<i64: 3, 32, 32>}, {pipeline_mode = #tpu.pipeline_mode<synchronous>, transform_indices = @transform_4, window_bounds = array<i64: 3, 1, 32>}, {pipeline_mode = #tpu.pipeline_mode<synchronous>, transform_indices = @transform_5, window_bounds = array<i64: 32, 32>}, {pipeline_mode = #tpu.pipeline_mode<synchronous>, transform_indices = @transform_6, window_bounds = array<i64: 32, 32>}, {pipeline_mode = #tpu.pipeline_mode<synchronous>, transform_indices = @transform_7, window_bounds = array<i64: 1, 32>}, {transform_indices = @transform_8, window_bounds = array<i64: 2, 16, 32>}]} {
    %c0 = arith.constant 0 : index
    %c0_0 = arith.constant 0 : index
    %c0_1 = arith.constant 0 : index
    %0 = vector.load %arg1[%c0, %c0_0, %c0_1] : memref<2x16x32xf32, #tpu.memory_space<vmem>>, vector<2x16x32xf32>
    %1 = vector.shape_cast %0 : vector<2x16x32xf32> to vector<32x32xf32>
    %c0_2 = arith.constant 0 : index
    %c0_3 = arith.constant 0 : index
    %c0_4 = arith.constant 0 : index
    %2 = vector.load %arg4[%c0_2, %c0_3, %c0_4] : memref<3x32x32xf32, #tpu.memory_space<vmem>>, vector<1x32x32xf32>
    %3 = vector.shape_cast %2 : vector<1x32x32xf32> to vector<32x32xf32>
    %cst = arith.constant dense<0.000000e+00> : vector<32x32xf32>
    %4 = tpu.matmul %1, %3, %cst {dimension_numbers = #tpu.dot_dimension_numbers<[1], [0], [0], [1], [0, 0, 1, 1], [], []>} : vector<32x32xf32>, vector<32x32xf32>, vector<32x32xf32> -> vector<32x32xf32>
    %c0_5 = arith.constant 0 : index
    %c0_6 = arith.constant 0 : index
    %c0_7 = arith.constant 0 : index
    %5 = vector.load %arg5[%c0_5, %c0_6, %c0_7] : memref<3x1x32xf32, #tpu.memory_space<vmem>>, vector<1x1x32xf32>
    %6 = vector.shape_cast %5 : vector<1x1x32xf32> to vector<1x32xf32>
    %7 = vector.broadcast %6 : vector<1x32xf32> to vector<32x32xf32>
    %8 = arith.addf %4, %7 : vector<32x32xf32>
    %c0_8 = arith.constant 0 : index
    %c0_9 = arith.constant 0 : index
    %c0_10 = arith.constant 0 : index
    %9 = vector.load %arg2[%c0_8, %c0_9, %c0_10] : memref<2x16x32xf32, #tpu.memory_space<vmem>>, vector<2x16x32xf32>
    %10 = vector.shape_cast %9 : vector<2x16x32xf32> to vector<32x32xf32>
    %c1 = arith.constant 1 : index
    %c0_11 = arith.constant 0 : index
    %c0_12 = arith.constant 0 : index
    %11 = vector.load %arg4[%c1, %c0_11, %c0_12] : memref<3x32x32xf32, #tpu.memory_space<vmem>>, vector<1x32x32xf32>
    %12 = vector.shape_cast %11 : vector<1x32x32xf32> to vector<32x32xf32>
    %cst_13 = arith.constant dense<0.000000e+00> : vector<32x32xf32>
    %13 = tpu.matmul %10, %12, %cst_13 {dimension_numbers = #tpu.dot_dimension_numbers<[1], [0], [0], [1], [0, 0, 1, 1], [], []>} : vector<32x32xf32>, vector<32x32xf32>, vector<32x32xf32> -> vector<32x32xf32>
    %c1_14 = arith.constant 1 : index
    %c0_15 = arith.constant 0 : index
    %c0_16 = arith.constant 0 : index
    %14 = vector.load %arg5[%c1_14, %c0_15, %c0_16] : memref<3x1x32xf32, #tpu.memory_space<vmem>>, vector<1x1x32xf32>
    %15 = vector.shape_cast %14 : vector<1x1x32xf32> to vector<1x32xf32>
    %16 = vector.broadcast %15 : vector<1x32xf32> to vector<32x32xf32>
    %17 = arith.addf %13, %16 : vector<32x32xf32>
    %c0_17 = arith.constant 0 : index
    %c0_18 = arith.constant 0 : index
    %c0_19 = arith.constant 0 : index
    %18 = vector.load %arg3[%c0_17, %c0_18, %c0_19] : memref<2x16x32xf32, #tpu.memory_space<vmem>>, vector<2x16x32xf32>
    %19 = vector.shape_cast %18 : vector<2x16x32xf32> to vector<32x32xf32>
    %c2 = arith.constant 2 : index
    %c0_20 = arith.constant 0 : index
    %c0_21 = arith.constant 0 : index
    %20 = vector.load %arg4[%c2, %c0_20, %c0_21] : memref<3x32x32xf32, #tpu.memory_space<vmem>>, vector<1x32x32xf32>
    %21 = vector.shape_cast %20 : vector<1x32x32xf32> to vector<32x32xf32>
    %cst_22 = arith.constant dense<0.000000e+00> : vector<32x32xf32>
    %22 = tpu.matmul %19, %21, %cst_22 {dimension_numbers = #tpu.dot_dimension_numbers<[1], [0], [0], [1], [0, 0, 1, 1], [], []>} : vector<32x32xf32>, vector<32x32xf32>, vector<32x32xf32> -> vector<32x32xf32>
    %c2_23 = arith.constant 2 : index
    %c0_24 = arith.constant 0 : index
    %c0_25 = arith.constant 0 : index
    %23 = vector.load %arg5[%c2_23, %c0_24, %c0_25] : memref<3x1x32xf32, #tpu.memory_space<vmem>>, vector<1x1x32xf32>
    %24 = vector.shape_cast %23 : vector<1x1x32xf32> to vector<1x32xf32>
    %25 = vector.broadcast %24 : vector<1x32xf32> to vector<32x32xf32>
    %26 = arith.addf %22, %25 : vector<32x32xf32>
    %cst_26 = arith.constant 0.000000e+00 : f32
    %27 = vector.broadcast %cst_26 : f32 to vector<32x32xf32>
    %28 = arith.cmpf ogt, %8, %27 : vector<32x32xf32>
    %cst_27 = arith.constant 1.000000e+00 : f32
    %29 = vector.broadcast %cst_27 : f32 to vector<32x32xf32>
    %30 = arith.addf %8, %29 : vector<32x32xf32>
    %31 = math.exp %8 : vector<32x32xf32>
    %32 = arith.select %28, %30, %31 : vector<32x32xi1>, vector<32x32xf32>
    %cst_28 = arith.constant 0.000000e+00 : f32
    %33 = vector.broadcast %cst_28 : f32 to vector<32x32xf32>
    %34 = arith.cmpf ogt, %17, %33 : vector<32x32xf32>
    %cst_29 = arith.constant 1.000000e+00 : f32
    %35 = vector.broadcast %cst_29 : f32 to vector<32x32xf32>
    %36 = arith.addf %17, %35 : vector<32x32xf32>
    %37 = math.exp %17 : vector<32x32xf32>
    %38 = arith.select %34, %36, %37 : vector<32x32xi1>, vector<32x32xf32>
    %39 = vector.shape_cast %32 : vector<32x32xf32> to vector<2x16x32xf32>
    %40 = vector.shape_cast %38 : vector<32x32xf32> to vector<2x16x32xf32>
    %41 = vector.shape_cast %26 : vector<32x32xf32> to vector<2x16x32xf32>
    %42 = tpu.transpose %40, [0, 2, 1] : vector<2x16x32xf32> -> vector<2x32x16xf32>
    %cst_30 = arith.constant dense<0.000000e+00> : vector<2x32x32xf32>
    %43 = tpu.matmul %42, %41, %cst_30 {dimension_numbers = #tpu.dot_dimension_numbers<[2], [1], [1], [2], [0, 0, 0, 1, 1, 2], [0], [0]>} : vector<2x32x16xf32>, vector<2x16x32xf32>, vector<2x32x32xf32> -> vector<2x32x32xf32>
    %cst_31 = arith.constant dense<0.000000e+00> : vector<2x32xf32>
    %44 = vector.multi_reduction <add>, %40, %cst_31 [1] : vector<2x16x32xf32> to vector<2x32xf32>
    %45 = vector.shape_cast %44 : vector<2x32xf32> to vector<2x1x32xf32>
    %46 = vector.broadcast %45 : vector<2x1x32xf32> to vector<2x16x32xf32>
    %47 = arith.mulf %39, %46 : vector<2x16x32xf32>
    %48 = vector.shape_cast %47 : vector<2x16x32xf32> to vector<32x32xf32>
    %c0_32 = arith.constant 0 : index
    %c0_33 = arith.constant 0 : index
    %49 = vector.load %arg6[%c0_32, %c0_33] : memref<32x32xf32, #tpu.memory_space<vmem>>, vector<32x32xf32>
    %50 = vector.shape_cast %49 : vector<32x32xf32> to vector<1x32x32xf32>
    %51 = vector.broadcast %50 : vector<1x32x32xf32> to vector<2x32x32xf32>
    %52 = arith.mulf %43, %51 : vector<2x32x32xf32>
    %cst_34 = arith.constant dense<0.000000e+00> : vector<32x32xf32>
    %53 = tpu.matmul %48, %49, %cst_34 {dimension_numbers = #tpu.dot_dimension_numbers<[1], [0], [0], [1], [0, 0, 1, 1], [], []>} : vector<32x32xf32>, vector<32x32xf32>, vector<32x32xf32> -> vector<32x32xf32>
    %cst_35 = arith.constant dense<0.000000e+00> : vector<2x16x32xf32>
    %54 = tpu.matmul %39, %52, %cst_35 {dimension_numbers = #tpu.dot_dimension_numbers<[2], [1], [1], [2], [0, 0, 0, 1, 1, 2], [0], [0]>} : vector<2x16x32xf32>, vector<2x32x32xf32>, vector<2x16x32xf32> -> vector<2x16x32xf32>
    %55 = vector.shape_cast %54 : vector<2x16x32xf32> to vector<32x32xf32>
    %cst_36 = arith.constant 9.99999997E-7 : f32
    %56 = vector.broadcast %cst_36 : f32 to vector<32x32xf32>
    %57 = arith.addf %53, %56 : vector<32x32xf32>
    %58 = tpu.reciprocal %57 {approx = true} : vector<32x32xf32> -> vector<32x32xf32>
    %59 = arith.mulf %55, %58 : vector<32x32xf32>
    %c0_37 = arith.constant 0 : index
    %c0_38 = arith.constant 0 : index
    %60 = vector.load %arg7[%c0_37, %c0_38] : memref<32x32xf32, #tpu.memory_space<vmem>>, vector<32x32xf32>
    %cst_39 = arith.constant dense<0.000000e+00> : vector<32x32xf32>
    %61 = tpu.matmul %59, %60, %cst_39 {dimension_numbers = #tpu.dot_dimension_numbers<[1], [0], [0], [1], [0, 0, 1, 1], [], []>} : vector<32x32xf32>, vector<32x32xf32>, vector<32x32xf32> -> vector<32x32xf32>
    %c0_40 = arith.constant 0 : index
    %c0_41 = arith.constant 0 : index
    %62 = vector.load %arg8[%c0_40, %c0_41] : memref<1x32xf32, #tpu.memory_space<vmem>>, vector<1x32xf32>
    %63 = vector.broadcast %62 : vector<1x32xf32> to vector<32x32xf32>
    %64 = arith.addf %61, %63 : vector<32x32xf32>
    %65 = vector.shape_cast %64 : vector<32x32xf32> to vector<2x16x32xf32>
    %c0_42 = arith.constant 0 : index
    %c0_43 = arith.constant 0 : index
    %c0_44 = arith.constant 0 : index
    %66 = vector.load %arg9[%c0_42, %c0_43, %c0_44] : memref<2x16x32xf32, #tpu.memory_space<vmem>>, vector<2x16x32xf32>
    tpu.vector_store %arg9[%c0_42, %c0_43, %c0_44], %65 {strides = array<i32>} : memref<2x16x32xf32, #tpu.memory_space<vmem>>, vector<2x16x32xf32>,
    return
  }
  func.func @transform_0(%arg0: i32) -> (i32, i32, i32) {
    %c0_i32 = arith.constant 0 : i32
    %c0_i32_0 = arith.constant 0 : i32
    %c0_i32_1 = arith.constant 0 : i32
    return %arg0, %c0_i32, %c0_i32_0 : i32, i32, i32
  }
  func.func @transform_1(%arg0: i32) -> (i32, i32, i32) {
    %c0_i32 = arith.constant 0 : i32
    %c0_i32_0 = arith.constant 0 : i32
    %c0_i32_1 = arith.constant 0 : i32
    return %arg0, %c0_i32, %c0_i32_0 : i32, i32, i32
  }
  func.func @transform_2(%arg0: i32) -> (i32, i32, i32) {
    %c0_i32 = arith.constant 0 : i32
    %c0_i32_0 = arith.constant 0 : i32
    %c0_i32_1 = arith.constant 0 : i32
    return %arg0, %c0_i32, %c0_i32_0 : i32, i32, i32
  }
  func.func @transform_3(%arg0: i32) -> (i32, i32, i32) {
    %c0_i32 = arith.constant 0 : i32
    %c0_i32_0 = arith.constant 0 : i32
    %c0_i32_1 = arith.constant 0 : i32
    %c0_i32_2 = arith.constant 0 : i32
    return %c0_i32, %c0_i32_0, %c0_i32_1 : i32, i32, i32
  }
  func.func @transform_4(%arg0: i32) -> (i32, i32, i32) {
    %c0_i32 = arith.constant 0 : i32
    %c0_i32_0 = arith.constant 0 : i32
    %c0_i32_1 = arith.constant 0 : i32
    %c0_i32_2 = arith.constant 0 : i32
    return %c0_i32, %c0_i32_0, %c0_i32_1 : i32, i32, i32
  }
  func.func @transform_5(%arg0: i32) -> (i32, i32) {
    %c0_i32 = arith.constant 0 : i32
    %c0_i32_0 = arith.constant 0 : i32
    %c0_i32_1 = arith.constant 0 : i32
    return %c0_i32, %c0_i32_0 : i32, i32
  }
  func.func @transform_6(%arg0: i32) -> (i32, i32) {
    %c0_i32 = arith.constant 0 : i32
    %c0_i32_0 = arith.constant 0 : i32
    %c0_i32_1 = arith.constant 0 : i32
    return %c0_i32, %c0_i32_0 : i32, i32
  }
  func.func @transform_7(%arg0: i32) -> (i32, i32) {
    %c0_i32 = arith.constant 0 : i32
    %c0_i32_0 = arith.constant 0 : i32
    %c0_i32_1 = arith.constant 0 : i32
    return %c0_i32, %c0_i32_0 : i32, i32
  }
  func.func @transform_8(%arg0: i32) -> (i32, i32, i32) {
    %c0_i32 = arith.constant 0 : i32
    %c0_i32_0 = arith.constant 0 : i32
    %c0_i32_1 = arith.constant 0 : i32
    return %arg0, %c0_i32, %c0_i32_0 : i32, i32, i32
  }
}

</mosaic_0001>

<llo_original>
// kernel: tpu_custom_call.1
$region0: #{tpu_custom_call.1}
  #allocation0 [shape = 'u32[]', space=smem, size = 0x4, offset = 0x4, fixed_abs, tag = 'smem constant byte address 0x4 - core index']
  #allocation1 [shape = 'u32[144,128]{1,0:T(1,128)}', space=vmem, size = 0x12000, scoped, tag = 'internal scratch']
  %s0 = inlined_call_operand.hbm [shape: f32[2,16,32], index: 0, kind: input, shape index: {}]
  %s1 = inlined_call_operand.hbm [shape: f32[2,16,32], index: 1, kind: input, shape index: {}]
  %s2 = inlined_call_operand.hbm [shape: f32[2,16,32], index: 2, kind: input, shape index: {}]
  %s3 = inlined_call_operand.hbm [shape: f32[3,32,32], index: 3, kind: input, shape index: {}]
  %s4 = inlined_call_operand.hbm [shape: f32[3,1,32], index: 4, kind: input, shape index: {}]
  %s5 = inlined_call_operand.hbm [shape: f32[32,32], index: 5, kind: input, shape index: {}]
  %s6 = inlined_call_operand.hbm [shape: f32[32,32], index: 6, kind: input, shape index: {}]
  %s7 = inlined_call_operand.hbm [shape: f32[1,32], index: 7, kind: input, shape index: {}]
  %s8 = inlined_call_operand.hbm [shape: f32[2,16,32], index: 8, kind: output, shape index: {}]
  %s9 = sld [smem:[#allocation0]]
  $region74: #{tpu_custom_call.1} parent=0
    _
  %s11 = ssub.s32 1, %s9
  %s12 = scalar_select 0, %s11, %s9
  $region1: #{tpu_custom_call.1} parent=0
    #allocation2 [shape = 'u8[16384]{0}', space=vmem, size = 0x4000, scoped, tag = 'input window, operand 0, single buffered']
    #allocation3 [shape = 's32[1]{0}', space=sflag, size = 0x4, scoped, tag = 'scoped memory for tpu_custom_call.1']
    #allocation4 [shape = 's32[1]{0}', space=sflag, size = 0x4, scoped, tag = 'scoped memory for tpu_custom_call.1']
    #allocation5 [shape = 'u8[16384]{0}', space=vmem, size = 0x4000, scoped, tag = 'input window, operand 1, single buffered']
    #allocation6 [shape = 's32[1]{0}', space=sflag, size = 0x4, scoped, tag = 'scoped memory for tpu_custom_call.1']
    #allocation7 [shape = 'u8[16384]{0}', space=vmem, size = 0x4000, scoped, tag = 'input window, operand 2, single buffered']
    #allocation8 [shape = 'u8[49152]{0}', space=vmem, size = 0xc000, scoped, tag = 'input window, operand 3, single buffered']
    #allocation9 [shape = 's32[1]{0}', space=sflag, size = 0x4, scoped, tag = 'scoped memory for tpu_custom_call.1']
    #allocation10 [shape = 'u8[1536]{0}', space=vmem, size = 0x800, scoped, tag = 'input window, operand 4, single buffered']
    #allocation11 [shape = 'u8[16384]{0}', space=vmem, size = 0x4000, scoped, tag = 'input window, operand 5, single buffered']
    #allocation12 [shape = 's32[1]{0}', space=sflag, size = 0x4, scoped, tag = 'scoped memory for tpu_custom_call.1']
    #allocation13 [shape = 'u8[16384]{0}', space=vmem, size = 0x4000, scoped, tag = 'input window, operand 6, single buffered']
    #allocation14 [shape = 'u8[512]{0}', space=vmem, size = 0x400, scoped, tag = 'input window, operand 7, single buffered']
    #allocation15 [shape = 's32[1]{0}', space=sflag, size = 0x4, scoped, tag = 'scoped memory for tpu_custom_call.1']
    #allocation16 [shape = 'u8[16384]{0}', space=vmem, size = 0x4000, scoped, tag = 'output window, operand 0, single buffered']
    %13 = vsyncpa [#allocation3], 0
    %14 = vsyncpa [#allocation6], 0
    %15 = vsyncpa [#allocation9], 0
    %16 = vsyncpa [#allocation12], 0
    %17 = vsyncpa [#allocation15], 0
    %18 = vsyncpa [#allocation4], 0
    // Predicated region
    $region2: #{tpu_custom_call.1} parent=1 // pred_check
      _
    $region3: #{tpu_custom_call.1} parent=1 // pred_check_branch
      %20 = sbr.rel (0) target = $region5
    $region4: #{tpu_custom_call.1} parent=1 // pred_region
      %s22 = ssub.s32 512, 512
      %23 = vsyncadd [#allocation3], %s22
      %s24 = sshll.u32 [#allocation2], 4
      %s25 = int_to_ptr.vmem [resolvable:$true] %s24
      %30 = dma.hbm_to_vmem [thread:$0]  %s0, 512, %s25, [#allocation3], 128, 128, 8
    $region5: #{tpu_custom_call.1} parent=1 // pred_fallthru
      _
    // Predicated region
    $region6: #{tpu_custom_call.1} parent=1 // pred_check
      _
    $region7: #{tpu_custom_call.1} parent=1 // pred_check_branch
      %32 = sbr.rel (0) target = $region9
    $region8: #{tpu_custom_call.1} parent=1 // pred_region
      %s34 = ssub.s32 512, 512
      %35 = vsyncadd [#allocation6], %s34
      %s36 = sshll.u32 [#allocation5], 4
      %s37 = int_to_ptr.vmem [resolvable:$true] %s36
      %42 = dma.hbm_to_vmem [thread:$0]  %s1, 512, %s37, [#allocation6], 128, 128, 8
    $region9: #{tpu_custom_call.1} parent=1 // pred_fallthru
      _
    // Predicated region
    $region10: #{tpu_custom_call.1} parent=1 // pred_check
      _
    $region11: #{tpu_custom_call.1} parent=1 // pred_check_branch
      %44 = sbr.rel (0) target = $region13
    $region12: #{tpu_custom_call.1} parent=1 // pred_region
      %s46 = ssub.s32 512, 512
      %47 = vsyncadd [#allocation6], %s46
      %s48 = sshll.u32 [#allocation7], 4
      %s49 = int_to_ptr.vmem [resolvable:$true] %s48
      %54 = dma.hbm_to_vmem [thread:$0]  %s2, 512, %s49, [#allocation6], 128, 128, 8
    $region13: #{tpu_custom_call.1} parent=1 // pred_fallthru
      _
    // Predicated region
    $region14: #{tpu_custom_call.1} parent=1 // pred_check
      _
    $region15: #{tpu_custom_call.1} parent=1 // pred_check_branch
      %56 = sbr.rel (0) target = $region17
    $region16: #{tpu_custom_call.1} parent=1 // pred_region
      %s58 = ssub.s32 1536, 1536
      %59 = vsyncadd [#allocation9], %s58
      %s60 = sshll.u32 [#allocation8], 4
      %s61 = int_to_ptr.vmem [resolvable:$true] %s60
      %66 = dma.hbm_to_vmem [thread:$0]  %s3, 1536, %s61, [#allocation9], 128, 128, 8
    $region17: #{tpu_custom_call.1} parent=1 // pred_fallthru
      _
    // Predicated region
    $region18: #{tpu_custom_call.1} parent=1 // pred_check
      _
    $region19: #{tpu_custom_call.1} parent=1 // pred_check_branch
      %68 = sbr.rel (0) target = $region21
    $region20: #{tpu_custom_call.1} parent=1 // pred_region
      %s70 = ssub.s32 48, 48
      %71 = vsyncadd [#allocation9], %s70
      %s72 = sshll.u32 [#allocation10], 4
      %s73 = int_to_ptr.vmem [resolvable:$true] %s72
      %78 = dma.hbm_to_vmem [thread:$0]  %s4, 48, %s73, [#allocation9], 16, 16, 1
    $region21: #{tpu_custom_call.1} parent=1 // pred_fallthru
      _
    // Predicated region
    $region22: #{tpu_custom_call.1} parent=1 // pred_check
      _
    $region23: #{tpu_custom_call.1} parent=1 // pred_check_branch
      %80 = sbr.rel (0) target = $region25
    $region24: #{tpu_custom_call.1} parent=1 // pred_region
      %s82 = ssub.s32 512, 512
      %83 = vsyncadd [#allocation12], %s82
      %s84 = sshll.u32 [#allocation11], 4
      %s85 = int_to_ptr.vmem [resolvable:$true] %s84
      %90 = dma.hbm_to_vmem [thread:$0]  %s5, 512, %s85, [#allocation12], 128, 128, 8
    $region25: #{tpu_custom_call.1} parent=1 // pred_fallthru
      _
    // Predicated region
    $region26: #{tpu_custom_call.1} parent=1 // pred_check
      _
    $region27: #{tpu_custom_call.1} parent=1 // pred_check_branch
      %92 = sbr.rel (0) target = $region29
    $region28: #{tpu_custom_call.1} parent=1 // pred_region
      %s94 = ssub.s32 512, 512
      %95 = vsyncadd [#allocation12], %s94
      %s96 = sshll.u32 [#allocation13], 4
      %s97 = int_to_ptr.vmem [resolvable:$true] %s96
      %102 = dma.hbm_to_vmem [thread:$0]  %s6, 512, %s97, [#allocation12], 128, 128, 8
    $region29: #{tpu_custom_call.1} parent=1 // pred_fallthru
      _
    // Predicated region
    $region30: #{tpu_custom_call.1} parent=1 // pred_check
      _
    $region31: #{tpu_custom_call.1} parent=1 // pred_check_branch
      %104 = sbr.rel (0) target = $region33
    $region32: #{tpu_custom_call.1} parent=1 // pred_region
      %s106 = ssub.s32 16, 16
      %107 = vsyncadd [#allocation15], %s106
      %s109 = sshll.u32 [#allocation14], 4
      %s110 = int_to_ptr.vmem [resolvable:$true] %s109
      %112 = dma.hbm_to_vmem [thread:$0]  %s7, 16, %s110, [#allocation15]
    $region33: #{tpu_custom_call.1} parent=1 // pred_fallthru
      _
    // Predicated region
    $region34: #{tpu_custom_call.1} parent=1 // pred_check
      _
    $region35: #{tpu_custom_call.1} parent=1 // pred_check_branch
      %114 = sbr.rel (0) target = $region37
    $region36: #{tpu_custom_call.1} parent=1 // pred_region
      %115 = dma.done [#allocation3], 512
    $region37: #{tpu_custom_call.1} parent=1 // pred_fallthru
      _
    // Predicated region
    $region38: #{tpu_custom_call.1} parent=1 // pred_check
      _
    $region39: #{tpu_custom_call.1} parent=1 // pred_check_branch
      %117 = sbr.rel (0) target = $region41
    $region40: #{tpu_custom_call.1} parent=1 // pred_region
      %118 = dma.done [#allocation6], 512
    $region41: #{tpu_custom_call.1} parent=1 // pred_fallthru
      _
    // Predicated region
    $region42: #{tpu_custom_call.1} parent=1 // pred_check
      _
    $region43: #{tpu_custom_call.1} parent=1 // pred_check_branch
      %120 = sbr.rel (0) target = $region45
    $region44: #{tpu_custom_call.1} parent=1 // pred_region
      %121 = dma.done [#allocation6], 512
    $region45: #{tpu_custom_call.1} parent=1 // pred_fallthru
      _
    // Predicated region
    $region46: #{tpu_custom_call.1} parent=1 // pred_check
      _
    $region47: #{tpu_custom_call.1} parent=1 // pred_check_branch
      %123 = sbr.rel (0) target = $region49
    $region48: #{tpu_custom_call.1} parent=1 // pred_region
      %124 = dma.done [#allocation9], 1536
    $region49: #{tpu_custom_call.1} parent=1 // pred_fallthru
      _
    // Predicated region
    $region50: #{tpu_custom_call.1} parent=1 // pred_check
      _
    $region51: #{tpu_custom_call.1} parent=1 // pred_check_branch
      %126 = sbr.rel (0) target = $region53
    $region52: #{tpu_custom_call.1} parent=1 // pred_region
      %127 = dma.done [#allocation9], 48
    $region53: #{tpu_custom_call.1} parent=1 // pred_fallthru
      _
    // Predicated region
    $region54: #{tpu_custom_call.1} parent=1 // pred_check
      _
    $region55: #{tpu_custom_call.1} parent=1 // pred_check_branch
      %129 = sbr.rel (0) target = $region57
    $region56: #{tpu_custom_call.1} parent=1 // pred_region
      %130 = dma.done [#allocation12], 512
    $region57: #{tpu_custom_call.1} parent=1 // pred_fallthru
      _
    // Predicated region
    $region58: #{tpu_custom_call.1} parent=1 // pred_check
      _
    $region59: #{tpu_custom_call.1} parent=1 // pred_check_branch
      %132 = sbr.rel (0) target = $region61
    $region60: #{tpu_custom_call.1} parent=1 // pred_region
      %133 = dma.done [#allocation12], 512
    $region61: #{tpu_custom_call.1} parent=1 // pred_fallthru
      _
    // Predicated region
    $region62: #{tpu_custom_call.1} parent=1 // pred_check
      _
    $region63: #{tpu_custom_call.1} parent=1 // pred_check_branch
      %135 = sbr.rel (0) target = $region65
    $region64: #{tpu_custom_call.1} parent=1 // pred_region
      %136 = dma.done [#allocation15], 16
    $region65: #{tpu_custom_call.1} parent=1 // pred_fallthru
      _
    %v137 = vld [vmem:[#allocation2] sm:$0xff]
    %v138 = vld [vmem:[#allocation2 + $0x8] sm:$0xff]
    %v139 = vld [vmem:[#allocation2 + $0x10] sm:$0xff]
    %v140 = vld [vmem:[#allocation2 + $0x18] sm:$0xff]
    %v141 = vld [vmem:[#allocation8] sm:$0xff]
    %v142 = vld [vmem:[#allocation8 + $0x8] sm:$0xff]
    %v143 = vld [vmem:[#allocation8 + $0x10] sm:$0xff]
    %v144 = vld [vmem:[#allocation8 + $0x18] sm:$0xff]
    %v145 = vld [vmem:[#allocation10] sm:$0x1]
    %v147 = vlaneseq
    %v148 = vshrl.u32 %v147, 7
    %v149 = vsub.s32 0, %v148
    %v150 = vrot.slane %v145, %v149
    %vm152 = vcmask 261120
    %v154 = vsel %vm152, %v137, 0
    %v157 = vsel %vm152, %v138, 0
    %v160 = vsel %vm152, %v139, 0
    %v163 = vsel %vm152, %v140, 0
    %165 = vmatprep.subr.mxu0 0.0
    %166 = vmatpush1.msra.mxu0 %v141
    %167 = vmatprep.subr.mxu0 0.0
    %168 = vmatpush1.msra.mxu0 %v142
    %169 = vmatprep.subr.mxu0 0.0
    %170 = vmatpush1.msra.mxu0 %v143
    %171 = vmatprep.subr.mxu0 0.0
    %172 = vmatpush1.msra.mxu0 %v144
    %173 = vmatprep.subr.mxu0 0.0
    %174 = vmatpush1.msra.mxu0 0.0
    %175 = vmatprep.subr.mxu0 0.0
    %176 = vmatpush1.msra.mxu0 0.0
    %177 = vmatprep.subr.mxu0 0.0
    %178 = vmatpush1.msra.mxu0 0.0
    %179 = vmatprep.subr.mxu0 0.0
    %180 = vmatpush1.msra.mxu0 0.0
    %181 = vmatprep.subr.mxu0 0.0
    %182 = vmatpush1.msra.mxu0 0.0
    %183 = vmatprep.subr.mxu0 0.0
    %184 = vmatpush1.msra.mxu0 0.0
    %185 = vmatprep.subr.mxu0 0.0
    %186 = vmatpush1.msra.mxu0 0.0
    %187 = vmatprep.subr.mxu0 0.0
    %188 = vmatpush1.msra.mxu0 0.0
    %189 = vmatprep.subr.mxu0 0.0
    %190 = vmatpush1.msra.mxu0 0.0
    %191 = vmatprep.subr.mxu0 0.0
    %192 = vmatpush1.msra.mxu0 0.0
    %193 = vmatprep.subr.mxu0 0.0
    %194 = vmatpush1.msra.mxu0 0.0
    %195 = vmatprep.subr.mxu0 0.0
    %196 = vmatpush1.msra.mxu0 0.0
    %197 = vmatprep.subr.mxu0 0.0
    %198 = vmatpush1.msra.mxu0 0.0
    %199 = vmatprep.subr.mxu0 0.0
    %200 = vmatpush1.msra.mxu0 0.0
    %201 = vmatprep.subr.mxu0 0.0
    %202 = vmatpush1.msra.mxu0 0.0
    %203 = vmatprep.subr.mxu0 0.0
    %204 = vmatpush1.msra.mxu0 0.0
    %205 = vmatprep.subr.mxu0 0.0
    %206 = vmatpush1.msra.mxu0 0.0
    %207 = vmatprep.subr.mxu0 0.0
    %208 = vmatpush1.msra.mxu0 0.0
    %209 = vmatprep.subr.mxu0 0.0
    %210 = vmatpush1.msra.mxu0 0.0
    %211 = vmatprep.subr.mxu0 0.0
    %212 = vmatpush1.msra.mxu0 0.0
    %213 = vmatprep.subr.mxu0 0.0
    %214 = vmatpush1.msra.mxu0 0.0
    %215 = vmatprep.subr.mxu0 0.0
    %216 = vmatpush1.msra.mxu0 0.0
    %217 = vmatprep.subr.mxu0 0.0
    %218 = vmatpush1.msra.mxu0 0.0
    %219 = vmatprep.subr.mxu0 0.0
    %220 = vmatpush1.msra.mxu0 0.0
    %221 = vmatprep.subr.mxu0 0.0
    %222 = vmatpush1.msra.mxu0 0.0
    %223 = vmatprep.subr.mxu0 0.0
    %224 = vmatpush1.msra.mxu0 0.0
    %225 = vmatprep.subr.mxu0 0.0
    %226 = vmatpush1.msra.mxu0 0.0
    %227 = vmatprep.subr.mxu0 0.0
    %228 = vmatpush1.msra.mxu0 0.0
    %229 = vmatprep.mubr.f32.mxu0 0.0
    %230 = vmatmul.mubr.f32.gmra.mrb[0].mxu0 %v154
    %v231 = vpop.f32.mrb[0].mxu0
    %v232 = vadd.f32 %v150, %v231
    %v233 = vpop.f32.mrb[0].mxu0
    %234 = vmatprep.mubr.f32.mxu0 0.0
    %235 = vmatmul.mubr.f32.gmra.mrb[0].mxu0 %v157
    %v236 = vpop.f32.mrb[0].mxu0
    %v237 = vadd.f32 %v150, %v236
    %v238 = vpop.f32.mrb[0].mxu0
    %239 = vmatprep.mubr.f32.mxu0 0.0
    %240 = vmatmul.mubr.f32.gmra.mrb[0].mxu0 %v160
    %v241 = vpop.f32.mrb[0].mxu0
    %v242 = vadd.f32 %v150, %v241
    %v243 = vpop.f32.mrb[0].mxu0
    %244 = vmatprep.mubr.f32.mxu0 0.0
    %245 = vmatmul.mubr.f32.gmra.mrb[0].mxu0 %v163
    %v246 = vpop.f32.mrb[0].mxu0
    %v247 = vadd.f32 %v150, %v246
    %v248 = vpop.f32.mrb[0].mxu0
    %249 = vdwg.mxu0
    %v250 = vld [vmem:[#allocation5] sm:$0xff]
    %v251 = vld [vmem:[#allocation5 + $0x8] sm:$0xff]
    %v252 = vld [vmem:[#allocation5 + $0x10] sm:$0xff]
    %v253 = vld [vmem:[#allocation5 + $0x18] sm:$0xff]
    %s254 = scalar_lea.vmem [#allocation8], 32
    %v255 = vld [vmem:[%s254] sm:$0xff]
    %v256 = vld [vmem:[%s254 + $0x8] sm:$0xff]
    %v257 = vld [vmem:[%s254 + $0x10] sm:$0xff]
    %v258 = vld [vmem:[%s254 + $0x18] sm:$0xff]
    %s259 = scalar_lea.vmem [#allocation10], 1
    %v260 = vld [vmem:[%s259] sm:$0x1]
    %v262 = vlaneseq
    %v263 = vshrl.u32 %v262, 7
    %v264 = vsub.s32 0, %v263
    %v265 = vrot.slane %v260, %v264
    %v268 = vsel %vm152, %v250, 0
    %v271 = vsel %vm152, %v251, 0
    %v274 = vsel %vm152, %v252, 0
    %v277 = vsel %vm152, %v253, 0
    %279 = vmatprep.subr.mxu0 0.0
    %280 = vmatpush1.msra.mxu0 %v255
    %281 = vmatprep.subr.mxu0 0.0
    %282 = vmatpush1.msra.mxu0 %v256
    %283 = vmatprep.subr.mxu0 0.0
    %284 = vmatpush1.msra.mxu0 %v257
    %285 = vmatprep.subr.mxu0 0.0
    %286 = vmatpush1.msra.mxu0 %v258
    %287 = vmatprep.subr.mxu0 0.0
    %288 = vmatpush1.msra.mxu0 0.0
    %289 = vmatprep.subr.mxu0 0.0
    %290 = vmatpush1.msra.mxu0 0.0
    %291 = vmatprep.subr.mxu0 0.0
    %292 = vmatpush1.msra.mxu0 0.0
    %293 = vmatprep.subr.mxu0 0.0
    %294 = vmatpush1.msra.mxu0 0.0
    %295 = vmatprep.subr.mxu0 0.0
    %296 = vmatpush1.msra.mxu0 0.0
    %297 = vmatprep.subr.mxu0 0.0
    %298 = vmatpush1.msra.mxu0 0.0
    %299 = vmatprep.subr.mxu0 0.0
    %300 = vmatpush1.msra.mxu0 0.0
    %301 = vmatprep.subr.mxu0 0.0
    %302 = vmatpush1.msra.mxu0 0.0
    %303 = vmatprep.subr.mxu0 0.0
    %304 = vmatpush1.msra.mxu0 0.0
    %305 = vmatprep.subr.mxu0 0.0
    %306 = vmatpush1.msra.mxu0 0.0
    %307 = vmatprep.subr.mxu0 0.0
    %308 = vmatpush1.msra.mxu0 0.0
    %309 = vmatprep.subr.mxu0 0.0
    %310 = vmatpush1.msra.mxu0 0.0
    %311 = vmatprep.subr.mxu0 0.0
    %312 = vmatpush1.msra.mxu0 0.0
    %313 = vmatprep.subr.mxu0 0.0
    %314 = vmatpush1.msra.mxu0 0.0
    %315 = vmatprep.subr.mxu0 0.0
    %316 = vmatpush1.msra.mxu0 0.0
    %317 = vmatprep.subr.mxu0 0.0
    %318 = vmatpush1.msra.mxu0 0.0
    %319 = vmatprep.subr.mxu0 0.0
    %320 = vmatpush1.msra.mxu0 0.0
    %321 = vmatprep.subr.mxu0 0.0
    %322 = vmatpush1.msra.mxu0 0.0
    %323 = vmatprep.subr.mxu0 0.0
    %324 = vmatpush1.msra.mxu0 0.0
    %325 = vmatprep.subr.mxu0 0.0
    %326 = vmatpush1.msra.mxu0 0.0
    %327 = vmatprep.subr.mxu0 0.0
    %328 = vmatpush1.msra.mxu0 0.0
    %329 = vmatprep.subr.mxu0 0.0
    %330 = vmatpush1.msra.mxu0 0.0
    %331 = vmatprep.subr.mxu0 0.0
    %332 = vmatpush1.msra.mxu0 0.0
    %333 = vmatprep.subr.mxu0 0.0
    %334 = vmatpush1.msra.mxu0 0.0
    %335 = vmatprep.subr.mxu0 0.0
    %336 = vmatpush1.msra.mxu0 0.0
    %337 = vmatprep.subr.mxu0 0.0
    %338 = vmatpush1.msra.mxu0 0.0
    %339 = vmatprep.subr.mxu0 0.0
    %340 = vmatpush1.msra.mxu0 0.0
    %341 = vmatprep.subr.mxu0 0.0
    %342 = vmatpush1.msra.mxu0 0.0
    %343 = vmatprep.mubr.f32.mxu0 0.0
    %344 = vmatmul.mubr.f32.gmra.mrb[0].mxu0 %v268
    %v345 = vpop.f32.mrb[0].mxu0
    %v346 = vadd.f32 %v265, %v345
    %v347 = vpop.f32.mrb[0].mxu0
    %348 = vmatprep.mubr.f32.mxu0 0.0
    %349 = vmatmul.mubr.f32.gmra.mrb[0].mxu0 %v271
    %v350 = vpop.f32.mrb[0].mxu0
    %v351 = vadd.f32 %v265, %v350
    %v352 = vpop.f32.mrb[0].mxu0
    %353 = vmatprep.mubr.f32.mxu0 0.0
    %354 = vmatmul.mubr.f32.gmra.mrb[0].mxu0 %v274
    %v355 = vpop.f32.mrb[0].mxu0
    %v356 = vadd.f32 %v265, %v355
    %v357 = vpop.f32.mrb[0].mxu0
    %358 = vmatprep.mubr.f32.mxu0 0.0
    %359 = vmatmul.mubr.f32.gmra.mrb[0].mxu0 %v277
    %v360 = vpop.f32.mrb[0].mxu0
    %v361 = vadd.f32 %v265, %v360
    %v362 = vpop.f32.mrb[0].mxu0
    %363 = vdwg.mxu0
    %v364 = vld [vmem:[#allocation7] sm:$0xff]
    %v365 = vld [vmem:[#allocation7 + $0x8] sm:$0xff]
    %v366 = vld [vmem:[#allocation7 + $0x10] sm:$0xff]
    %v367 = vld [vmem:[#allocation7 + $0x18] sm:$0xff]
    %s368 = scalar_lea.vmem [#allocation8], 64
    %v369 = vld [vmem:[%s368] sm:$0xff]
    %v370 = vld [vmem:[%s368 + $0x8] sm:$0xff]
    %v371 = vld [vmem:[%s368 + $0x10] sm:$0xff]
    %v372 = vld [vmem:[%s368 + $0x18] sm:$0xff]
    %s373 = scalar_lea.vmem [#allocation10], 2
    %v374 = vld [vmem:[%s373] sm:$0x1]
    %v376 = vlaneseq
    %v377 = vshrl.u32 %v376, 7
    %v378 = vsub.s32 0, %v377
    %v379 = vrot.slane %v374, %v378
    %v382 = vsel %vm152, %v364, 0
    %v385 = vsel %vm152, %v365, 0
    %v388 = vsel %vm152, %v366, 0
    %v391 = vsel %vm152, %v367, 0
    %393 = vmatprep.subr.mxu0 0.0
    %394 = vmatpush1.msra.mxu0 %v369
    %395 = vmatprep.subr.mxu0 0.0
    %396 = vmatpush1.msra.mxu0 %v370
    %397 = vmatprep.subr.mxu0 0.0
    %398 = vmatpush1.msra.mxu0 %v371
    %399 = vmatprep.subr.mxu0 0.0
    %400 = vmatpush1.msra.mxu0 %v372
    %401 = vmatprep.subr.mxu0 0.0
    %402 = vmatpush1.msra.mxu0 0.0
    %403 = vmatprep.subr.mxu0 0.0
    %404 = vmatpush1.msra.mxu0 0.0
    %405 = vmatprep.subr.mxu0 0.0
    %406 = vmatpush1.msra.mxu0 0.0
    %407 = vmatprep.subr.mxu0 0.0
    %408 = vmatpush1.msra.mxu0 0.0
    %409 = vmatprep.subr.mxu0 0.0
    %410 = vmatpush1.msra.mxu0 0.0
    %411 = vmatprep.subr.mxu0 0.0
    %412 = vmatpush1.msra.mxu0 0.0
    %413 = vmatprep.subr.mxu0 0.0
    %414 = vmatpush1.msra.mxu0 0.0
    %415 = vmatprep.subr.mxu0 0.0
    %416 = vmatpush1.msra.mxu0 0.0
    %417 = vmatprep.subr.mxu0 0.0
    %418 = vmatpush1.msra.mxu0 0.0
    %419 = vmatprep.subr.mxu0 0.0
    %420 = vmatpush1.msra.mxu0 0.0
    %421 = vmatprep.subr.mxu0 0.0
    %422 = vmatpush1.msra.mxu0 0.0
    %423 = vmatprep.subr.mxu0 0.0
    %424 = vmatpush1.msra.mxu0 0.0
    %425 = vmatprep.subr.mxu0 0.0
    %426 = vmatpush1.msra.mxu0 0.0
    %427 = vmatprep.subr.mxu0 0.0
    %428 = vmatpush1.msra.mxu0 0.0
    %429 = vmatprep.subr.mxu0 0.0
    %430 = vmatpush1.msra.mxu0 0.0
    %431 = vmatprep.subr.mxu0 0.0
    %432 = vmatpush1.msra.mxu0 0.0
    %433 = vmatprep.subr.mxu0 0.0
    %434 = vmatpush1.msra.mxu0 0.0
    %435 = vmatprep.subr.mxu0 0.0
    %436 = vmatpush1.msra.mxu0 0.0
    %437 = vmatprep.subr.mxu0 0.0
    %438 = vmatpush1.msra.mxu0 0.0
    %439 = vmatprep.subr.mxu0 0.0
    %440 = vmatpush1.msra.mxu0 0.0
    %441 = vmatprep.subr.mxu0 0.0
    %442 = vmatpush1.msra.mxu0 0.0
    %443 = vmatprep.subr.mxu0 0.0
    %444 = vmatpush1.msra.mxu0 0.0
    %445 = vmatprep.subr.mxu0 0.0
    %446 = vmatpush1.msra.mxu0 0.0
    %447 = vmatprep.subr.mxu0 0.0
    %448 = vmatpush1.msra.mxu0 0.0
    %449 = vmatprep.subr.mxu0 0.0
    %450 = vmatpush1.msra.mxu0 0.0
    %451 = vmatprep.subr.mxu0 0.0
    %452 = vmatpush1.msra.mxu0 0.0
    %453 = vmatprep.subr.mxu0 0.0
    %454 = vmatpush1.msra.mxu0 0.0
    %455 = vmatprep.subr.mxu0 0.0
    %456 = vmatpush1.msra.mxu0 0.0
    %457 = vmatprep.mubr.f32.mxu0 0.0
    %458 = vmatmul.mubr.f32.gmra.mrb[0].mxu0 %v382
    %v459 = vpop.f32.mrb[0].mxu0
    %v460 = vadd.f32 %v379, %v459
    %v461 = vpop.f32.mrb[0].mxu0
    %462 = vmatprep.mubr.f32.mxu0 0.0
    %463 = vmatmul.mubr.f32.gmra.mrb[0].mxu0 %v385
    %v464 = vpop.f32.mrb[0].mxu0
    %v465 = vadd.f32 %v379, %v464
    %v466 = vpop.f32.mrb[0].mxu0
    %467 = vmatprep.mubr.f32.mxu0 0.0
    %468 = vmatmul.mubr.f32.gmra.mrb[0].mxu0 %v388
    %v469 = vpop.f32.mrb[0].mxu0
    %v470 = vadd.f32 %v379, %v469
    %v471 = vpop.f32.mrb[0].mxu0
    %472 = vmatprep.mubr.f32.mxu0 0.0
    %473 = vmatmul.mubr.f32.gmra.mrb[0].mxu0 %v391
    %v474 = vpop.f32.mrb[0].mxu0
    %v475 = vadd.f32 %v379, %v474
    %v476 = vpop.f32.mrb[0].mxu0
    %477 = vdwg.mxu0
    %vm478 = vcmp.gt.f32.partialorder %v232, 0.0
    %vm479 = vcmp.gt.f32.partialorder %v237, 0.0
    %vm480 = vcmp.gt.f32.partialorder %v242, 0.0
    %vm481 = vcmp.gt.f32.partialorder %v247, 0.0
    %v482 = vadd.f32 %v232, 1.0
    %v483 = vadd.f32 %v237, 1.0
    %v484 = vadd.f32 %v242, 1.0
    %v485 = vadd.f32 %v247, 1.0
    %v486 = vmul.f32 %v232, 1.442695
    %v487 = vpow.pop %v486
    %v488 = vmul.f32 %v237, 1.442695
    %v489 = vpow.pop %v488
    %v490 = vmul.f32 %v242, 1.442695
    %v491 = vpow.pop %v490
    %v492 = vmul.f32 %v247, 1.442695
    %v493 = vpow.pop %v492
    %v494 = vsel %vm478, %v482, %v487
    %v495 = vsel %vm479, %v483, %v489
    %v496 = vsel %vm480, %v484, %v491
    %v497 = vsel %vm481, %v485, %v493
    %vm498 = vcmp.gt.f32.partialorder %v346, 0.0
    %vm499 = vcmp.gt.f32.partialorder %v351, 0.0
    %vm500 = vcmp.gt.f32.partialorder %v356, 0.0
    %vm501 = vcmp.gt.f32.partialorder %v361, 0.0
    %v502 = vadd.f32 %v346, 1.0
    %v503 = vadd.f32 %v351, 1.0
    %v504 = vadd.f32 %v356, 1.0
    %v505 = vadd.f32 %v361, 1.0
    %v506 = vmul.f32 %v346, 1.442695
    %v507 = vpow.pop %v506
    %v508 = vmul.f32 %v351, 1.442695
    %v509 = vpow.pop %v508
    %v510 = vmul.f32 %v356, 1.442695
    %v511 = vpow.pop %v510
    %v512 = vmul.f32 %v361, 1.442695
    %v513 = vpow.pop %v512
    %v514 = vsel %vm498, %v502, %v507
    %v515 = vsel %vm499, %v503, %v509
    %v516 = vsel %vm500, %v504, %v511
    %v517 = vsel %vm501, %v505, %v513
    %518 = vxpose.xlu0.b32.start [1/16] %v514, 128
    %519 = vxpose.xlu0.b32.cont [2/16] %v515, 128
    %520 = vxpose.xlu0.b32.cont [3/16] 0.0, 128
    %521 = vxpose.xlu0.b32.cont [4/16] 0.0, 128
    %522 = vxpose.xlu0.b32.cont [5/16] 0.0, 128
    %523 = vxpose.xlu0.b32.cont [6/16] 0.0, 128
    %524 = vxpose.xlu0.b32.cont [7/16] 0.0, 128
    %525 = vxpose.xlu0.b32.cont [8/16] 0.0, 128
    %526 = vxpose.xlu0.b32.cont [9/16] 0.0, 128
    %527 = vxpose.xlu0.b32.cont [10/16] 0.0, 128
    %528 = vxpose.xlu0.b32.cont [11/16] 0.0, 128
    %529 = vxpose.xlu0.b32.cont [12/16] 0.0, 128
    %530 = vxpose.xlu0.b32.cont [13/16] 0.0, 128
    %531 = vxpose.xlu0.b32.cont [14/16] 0.0, 128
    %532 = vxpose.xlu0.b32.cont [15/16] 0.0, 128
    %533 = vxpose.xlu0.b32.end [16/16] 0.0, 128
    %v534 = vpop.trf.xlu0
    %v535 = vpop.trf.xlu0
    %v536 = vpop.trf.xlu0
    %v537 = vpop.trf.xlu0
    %v538 = vpop.trf.xlu0
    %v539 = vpop.trf.xlu0
    %v540 = vpop.trf.xlu0
    %v541 = vpop.trf.xlu0
    %v542 = vpop.trf.xlu0
    %v543 = vpop.trf.xlu0
    %v544 = vpop.trf.xlu0
    %v545 = vpop.trf.xlu0
    %v546 = vpop.trf.xlu0
    %v547 = vpop.trf.xlu0
    %v548 = vpop.trf.xlu0
    %v549 = vpop.trf.xlu0
    %550 = vxpose.xlu0.b32.start [1/16] %v516, 128
    %551 = vxpose.xlu0.b32.cont [2/16] %v517, 128
    %552 = vxpose.xlu0.b32.cont [3/16] 0.0, 128
    %553 = vxpose.xlu0.b32.cont [4/16] 0.0, 128
    %554 = vxpose.xlu0.b32.cont [5/16] 0.0, 128
    %555 = vxpose.xlu0.b32.cont [6/16] 0.0, 128
    %556 = vxpose.xlu0.b32.cont [7/16] 0.0, 128
    %557 = vxpose.xlu0.b32.cont [8/16] 0.0, 128
    %558 = vxpose.xlu0.b32.cont [9/16] 0.0, 128
    %559 = vxpose.xlu0.b32.cont [10/16] 0.0, 128
    %560 = vxpose.xlu0.b32.cont [11/16] 0.0, 128
    %561 = vxpose.xlu0.b32.cont [12/16] 0.0, 128
    %562 = vxpose.xlu0.b32.cont [13/16] 0.0, 128
    %563 = vxpose.xlu0.b32.cont [14/16] 0.0, 128
    %564 = vxpose.xlu0.b32.cont [15/16] 0.0, 128
    %565 = vxpose.xlu0.b32.end [16/16] 0.0, 128
    %v566 = vpop.trf.xlu0
    %v567 = vpop.trf.xlu0
    %v568 = vpop.trf.xlu0
    %v569 = vpop.trf.xlu0
    %v570 = vpop.trf.xlu0
    %v571 = vpop.trf.xlu0
    %v572 = vpop.trf.xlu0
    %v573 = vpop.trf.xlu0
    %v574 = vpop.trf.xlu0
    %v575 = vpop.trf.xlu0
    %v576 = vpop.trf.xlu0
    %v577 = vpop.trf.xlu0
    %v578 = vpop.trf.xlu0
    %v579 = vpop.trf.xlu0
    %v580 = vpop.trf.xlu0
    %v581 = vpop.trf.xlu0
    %vm582 = vcmask 130048
    %v584 = vsel %vm582, %v534, 0
    %v587 = vsel %vm582, %v535, 0
    %v590 = vsel %vm582, %v536, 0
    %v593 = vsel %vm582, %v537, 0
    %595 = vmatprep.subr.mxu0 0.0
    %596 = vmatpush1.msra.mxu0 %v460
    %597 = vmatprep.subr.mxu0 0.0
    %598 = vmatpush1.msra.mxu0 %v465
    %599 = vmatprep.subr.mxu0 0.0
    %600 = vmatpush1.msra.mxu0 0.0
    %601 = vmatprep.subr.mxu0 0.0
    %602 = vmatpush1.msra.mxu0 0.0
    %603 = vmatprep.subr.mxu0 0.0
    %604 = vmatpush1.msra.mxu0 0.0
    %605 = vmatprep.subr.mxu0 0.0
    %606 = vmatpush1.msra.mxu0 0.0
    %607 = vmatprep.subr.mxu0 0.0
    %608 = vmatpush1.msra.mxu0 0.0
    %609 = vmatprep.subr.mxu0 0.0
    %610 = vmatpush1.msra.mxu0 0.0
    %611 = vmatprep.subr.mxu0 0.0
    %612 = vmatpush1.msra.mxu0 0.0
    %613 = vmatprep.subr.mxu0 0.0
    %614 = vmatpush1.msra.mxu0 0.0
    %615 = vmatprep.subr.mxu0 0.0
    %616 = vmatpush1.msra.mxu0 0.0
    %617 = vmatprep.subr.mxu0 0.0
    %618 = vmatpush1.msra.mxu0 0.0
    %619 = vmatprep.subr.mxu0 0.0
    %620 = vmatpush1.msra.mxu0 0.0
    %621 = vmatprep.subr.mxu0 0.0
    %622 = vmatpush1.msra.mxu0 0.0
    %623 = vmatprep.subr.mxu0 0.0
    %624 = vmatpush1.msra.mxu0 0.0
    %625 = vmatprep.subr.mxu0 0.0
    %626 = vmatpush1.msra.mxu0 0.0
    %627 = vmatprep.subr.mxu0 0.0
    %628 = vmatpush1.msra.mxu0 0.0
    %629 = vmatprep.subr.mxu0 0.0
    %630 = vmatpush1.msra.mxu0 0.0
    %631 = vmatprep.subr.mxu0 0.0
    %632 = vmatpush1.msra.mxu0 0.0
    %633 = vmatprep.subr.mxu0 0.0
    %634 = vmatpush1.msra.mxu0 0.0
    %635 = vmatprep.subr.mxu0 0.0
    %636 = vmatpush1.msra.mxu0 0.0
    %637 = vmatprep.subr.mxu0 0.0
    %638 = vmatpush1.msra.mxu0 0.0
    %639 = vmatprep.subr.mxu0 0.0
    %640 = vmatpush1.msra.mxu0 0.0
    %641 = vmatprep.subr.mxu0 0.0
    %642 = vmatpush1.msra.mxu0 0.0
    %643 = vmatprep.subr.mxu0 0.0
    %644 = vmatpush1.msra.mxu0 0.0
    %645 = vmatprep.subr.mxu0 0.0
    %646 = vmatpush1.msra.mxu0 0.0
    %647 = vmatprep.subr.mxu0 0.0
    %648 = vmatpush1.msra.mxu0 0.0
    %649 = vmatprep.subr.mxu0 0.0
    %650 = vmatpush1.msra.mxu0 0.0
    %651 = vmatprep.subr.mxu0 0.0
    %652 = vmatpush1.msra.mxu0 0.0
    %653 = vmatprep.subr.mxu0 0.0
    %654 = vmatpush1.msra.mxu0 0.0
    %655 = vmatprep.subr.mxu0 0.0
    %656 = vmatpush1.msra.mxu0 0.0
    %657 = vmatprep.subr.mxu0 0.0
    %658 = vmatpush1.msra.mxu0 0.0
    %659 = vmatprep.mubr.f32.mxu0 0.0
    %660 = vmatmul.mubr.f32.gmra.mrb[0].mxu0 %v584
    %v661 = vpop.f32.mrb[0].mxu0
    %v662 = vadd.f32 0.0, %v661
    %v663 = vpop.f32.mrb[0].mxu0
    %664 = vmatprep.mubr.f32.mxu0 0.0
    %665 = vmatmul.mubr.f32.gmra.mrb[0].mxu0 %v587
    %v666 = vpop.f32.mrb[0].mxu0
    %v667 = vadd.f32 0.0, %v666
    %v668 = vpop.f32.mrb[0].mxu0
    %669 = vmatprep.mubr.f32.mxu0 0.0
    %670 = vmatmul.mubr.f32.gmra.mrb[0].mxu0 %v590
    %v671 = vpop.f32.mrb[0].mxu0
    %v672 = vadd.f32 0.0, %v671
    %v673 = vpop.f32.mrb[0].mxu0
    %674 = vmatprep.mubr.f32.mxu0 0.0
    %675 = vmatmul.mubr.f32.gmra.mrb[0].mxu0 %v593
    %v676 = vpop.f32.mrb[0].mxu0
    %v677 = vadd.f32 0.0, %v676
    %v678 = vpop.f32.mrb[0].mxu0
    %679 = vdwg.mxu0
    %v681 = vsel %vm582, %v566, 0
    %v684 = vsel %vm582, %v567, 0
    %v687 = vsel %vm582, %v568, 0
    %v690 = vsel %vm582, %v569, 0
    %692 = vmatprep.subr.mxu0 0.0
    %693 = vmatpush1.msra.mxu0 %v470
    %694 = vmatprep.subr.mxu0 0.0
    %695 = vmatpush1.msra.mxu0 %v475
    %696 = vmatprep.subr.mxu0 0.0
    %697 = vmatpush1.msra.mxu0 0.0
    %698 = vmatprep.subr.mxu0 0.0
    %699 = vmatpush1.msra.mxu0 0.0
    %700 = vmatprep.subr.mxu0 0.0
    %701 = vmatpush1.msra.mxu0 0.0
    %702 = vmatprep.subr.mxu0 0.0
    %703 = vmatpush1.msra.mxu0 0.0
    %704 = vmatprep.subr.mxu0 0.0
    %705 = vmatpush1.msra.mxu0 0.0
    %706 = vmatprep.subr.mxu0 0.0
    %707 = vmatpush1.msra.mxu0 0.0
    %708 = vmatprep.subr.mxu0 0.0
    %709 = vmatpush1.msra.mxu0 0.0
    %710 = vmatprep.subr.mxu0 0.0
    %711 = vmatpush1.msra.mxu0 0.0
    %712 = vmatprep.subr.mxu0 0.0
    %713 = vmatpush1.msra.mxu0 0.0
    %714 = vmatprep.subr.mxu0 0.0
    %715 = vmatpush1.msra.mxu0 0.0
    %716 = vmatprep.subr.mxu0 0.0
    %717 = vmatpush1.msra.mxu0 0.0
    %718 = vmatprep.subr.mxu0 0.0
    %719 = vmatpush1.msra.mxu0 0.0
    %720 = vmatprep.subr.mxu0 0.0
    %721 = vmatpush1.msra.mxu0 0.0
    %722 = vmatprep.subr.mxu0 0.0
    %723 = vmatpush1.msra.mxu0 0.0
    %724 = vmatprep.subr.mxu0 0.0
    %725 = vmatpush1.msra.mxu0 0.0
    %726 = vmatprep.subr.mxu0 0.0
    %727 = vmatpush1.msra.mxu0 0.0
    %728 = vmatprep.subr.mxu0 0.0
    %729 = vmatpush1.msra.mxu0 0.0
    %730 = vmatprep.subr.mxu0 0.0
    %731 = vmatpush1.msra.mxu0 0.0
    %732 = vmatprep.subr.mxu0 0.0
    %733 = vmatpush1.msra.mxu0 0.0
    %734 = vmatprep.subr.mxu0 0.0
    %735 = vmatpush1.msra.mxu0 0.0
    %736 = vmatprep.subr.mxu0 0.0
    %737 = vmatpush1.msra.mxu0 0.0
    %738 = vmatprep.subr.mxu0 0.0
    %739 = vmatpush1.msra.mxu0 0.0
    %740 = vmatprep.subr.mxu0 0.0
    %741 = vmatpush1.msra.mxu0 0.0
    %742 = vmatprep.subr.mxu0 0.0
    %743 = vmatpush1.msra.mxu0 0.0
    %744 = vmatprep.subr.mxu0 0.0
    %745 = vmatpush1.msra.mxu0 0.0
    %746 = vmatprep.subr.mxu0 0.0
    %747 = vmatpush1.msra.mxu0 0.0
    %748 = vmatprep.subr.mxu0 0.0
    %749 = vmatpush1.msra.mxu0 0.0
    %750 = vmatprep.subr.mxu0 0.0
    %751 = vmatpush1.msra.mxu0 0.0
    %752 = vmatprep.subr.mxu0 0.0
    %753 = vmatpush1.msra.mxu0 0.0
    %754 = vmatprep.subr.mxu0 0.0
    %755 = vmatpush1.msra.mxu0 0.0
    %756 = vmatprep.mubr.f32.mxu0 0.0
    %757 = vmatmul.mubr.f32.gmra.mrb[0].mxu0 %v681
    %v758 = vpop.f32.mrb[0].mxu0
    %v759 = vadd.f32 0.0, %v758
    %v760 = vpop.f32.mrb[0].mxu0
    %761 = vmatprep.mubr.f32.mxu0 0.0
    %762 = vmatmul.mubr.f32.gmra.mrb[0].mxu0 %v684
    %v763 = vpop.f32.mrb[0].mxu0
    %v764 = vadd.f32 0.0, %v763
    %v765 = vpop.f32.mrb[0].mxu0
    %766 = vmatprep.mubr.f32.mxu0 0.0
    %767 = vmatmul.mubr.f32.gmra.mrb[0].mxu0 %v687
    %v768 = vpop.f32.mrb[0].mxu0
    %v769 = vadd.f32 0.0, %v768
    %v770 = vpop.f32.mrb[0].mxu0
    %771 = vmatprep.mubr.f32.mxu0 0.0
    %772 = vmatmul.mubr.f32.gmra.mrb[0].mxu0 %v690
    %v773 = vpop.f32.mrb[0].mxu0
    %v774 = vadd.f32 0.0, %v773
    %v775 = vpop.f32.mrb[0].mxu0
    %776 = vdwg.mxu0
    %v777 = vsel %vm152, %v514, 0.0
    %v778 = vsel %vm152, %v515, 0.0
    %v779 = vadd.f32 %v777, %v778
    %v780 = vrot.slane %v779, 4
    %v781 = vadd.f32 %v779, %v780
    %v782 = vrot.slane %v781, 2
    %v783 = vadd.f32 %v781, %v782
    %v784 = vrot.slane %v783, 1
    %v785 = vadd.f32 %v783, %v784
    %v786 = vsel %vm152, %v516, 0.0
    %v787 = vsel %vm152, %v517, 0.0
    %v788 = vadd.f32 %v786, %v787
    %v789 = vrot.slane %v788, 4
    %v790 = vadd.f32 %v788, %v789
    %v791 = vrot.slane %v790, 2
    %v792 = vadd.f32 %v790, %v791
    %v793 = vrot.slane %v792, 1
    %v794 = vadd.f32 %v792, %v793
    %v795 = vmul.f32 %v494, %v785
    %v796 = vmul.f32 %v495, %v785
    %v797 = vmul.f32 %v496, %v794
    %v798 = vmul.f32 %v497, %v794
    %v799 = vld [vmem:[#allocation11] sm:$0xff]
    %v800 = vld [vmem:[#allocation11 + $0x8] sm:$0xff]
    %v801 = vld [vmem:[#allocation11 + $0x10] sm:$0xff]
    %v802 = vld [vmem:[#allocation11 + $0x18] sm:$0xff]
    %v803 = vmul.f32 %v662, %v799
    %v804 = vmul.f32 %v667, %v800
    %v805 = vmul.f32 %v672, %v801
    %v806 = vmul.f32 %v677, %v802
    %v807 = vmul.f32 %v759, %v799
    %v808 = vmul.f32 %v764, %v800
    %v809 = vmul.f32 %v769, %v801
    %v810 = vmul.f32 %v774, %v802
    %v812 = vsel %vm152, %v494, 0
    %v815 = vsel %vm152, %v495, 0
    %817 = vmatprep.subr.mxu0 0.0
    %818 = vmatpush1.msra.mxu0 %v803
    %819 = vmatprep.subr.mxu0 0.0
    %820 = vmatpush1.msra.mxu0 %v804
    %821 = vmatprep.subr.mxu0 0.0
    %822 = vmatpush1.msra.mxu0 %v805
    %823 = vmatprep.subr.mxu0 0.0
    %824 = vmatpush1.msra.mxu0 %v806
    %825 = vmatprep.subr.mxu0 0.0
    %826 = vmatpush1.msra.mxu0 0.0
    %827 = vmatprep.subr.mxu0 0.0
    %828 = vmatpush1.msra.mxu0 0.0
    %829 = vmatprep.subr.mxu0 0.0
    %830 = vmatpush1.msra.mxu0 0.0
    %831 = vmatprep.subr.mxu0 0.0
    %832 = vmatpush1.msra.mxu0 0.0
    %833 = vmatprep.subr.mxu0 0.0
    %834 = vmatpush1.msra.mxu0 0.0
    %835 = vmatprep.subr.mxu0 0.0
    %836 = vmatpush1.msra.mxu0 0.0
    %837 = vmatprep.subr.mxu0 0.0
    %838 = vmatpush1.msra.mxu0 0.0
    %839 = vmatprep.subr.mxu0 0.0
    %840 = vmatpush1.msra.mxu0 0.0
    %841 = vmatprep.subr.mxu0 0.0
    %842 = vmatpush1.msra.mxu0 0.0
    %843 = vmatprep.subr.mxu0 0.0
    %844 = vmatpush1.msra.mxu0 0.0
    %845 = vmatprep.subr.mxu0 0.0
    %846 = vmatpush1.msra.mxu0 0.0
    %847 = vmatprep.subr.mxu0 0.0
    %848 = vmatpush1.msra.mxu0 0.0
    %849 = vmatprep.subr.mxu0 0.0
    %850 = vmatpush1.msra.mxu0 0.0
    %851 = vmatprep.subr.mxu0 0.0
    %852 = vmatpush1.msra.mxu0 0.0
    %853 = vmatprep.subr.mxu0 0.0
    %854 = vmatpush1.msra.mxu0 0.0
    %855 = vmatprep.subr.mxu0 0.0
    %856 = vmatpush1.msra.mxu0 0.0
    %857 = vmatprep.subr.mxu0 0.0
    %858 = vmatpush1.msra.mxu0 0.0
    %859 = vmatprep.subr.mxu0 0.0
    %860 = vmatpush1.msra.mxu0 0.0
    %861 = vmatprep.subr.mxu0 0.0
    %862 = vmatpush1.msra.mxu0 0.0
    %863 = vmatprep.subr.mxu0 0.0
    %864 = vmatpush1.msra.mxu0 0.0
    %865 = vmatprep.subr.mxu0 0.0
    %866 = vmatpush1.msra.mxu0 0.0
    %867 = vmatprep.subr.mxu0 0.0
    %868 = vmatpush1.msra.mxu0 0.0
    %869 = vmatprep.subr.mxu0 0.0
    %870 = vmatpush1.msra.mxu0 0.0
    %871 = vmatprep.subr.mxu0 0.0
    %872 = vmatpush1.msra.mxu0 0.0
    %873 = vmatprep.subr.mxu0 0.0
    %874 = vmatpush1.msra.mxu0 0.0
    %875 = vmatprep.subr.mxu0 0.0
    %876 = vmatpush1.msra.mxu0 0.0
    %877 = vmatprep.subr.mxu0 0.0
    %878 = vmatpush1.msra.mxu0 0.0
    %879 = vmatprep.subr.mxu0 0.0
    %880 = vmatpush1.msra.mxu0 0.0
    %881 = vmatprep.mubr.f32.mxu0 0.0
    %882 = vmatmul.mubr.f32.gmra.mrb[0].mxu0 %v812
    %v883 = vpop.f32.mrb[0].mxu0
    %v884 = vadd.f32 0.0, %v883
    %v885 = vpop.f32.mrb[0].mxu0
    %886 = vmatprep.mubr.f32.mxu0 0.0
    %887 = vmatmul.mubr.f32.gmra.mrb[0].mxu0 %v815
    %v888 = vpop.f32.mrb[0].mxu0
    %v889 = vadd.f32 0.0, %v888
    %v890 = vpop.f32.mrb[0].mxu0
    %891 = vdwg.mxu0
    %v893 = vsel %vm152, %v496, 0
    %v896 = vsel %vm152, %v497, 0
    %898 = vmatprep.subr.mxu0 0.0
    %899 = vmatpush1.msra.mxu0 %v807
    %900 = vmatprep.subr.mxu0 0.0
    %901 = vmatpush1.msra.mxu0 %v808
    %902 = vmatprep.subr.mxu0 0.0
    %903 = vmatpush1.msra.mxu0 %v809
    %904 = vmatprep.subr.mxu0 0.0
    %905 = vmatpush1.msra.mxu0 %v810
    %906 = vmatprep.subr.mxu0 0.0
    %907 = vmatpush1.msra.mxu0 0.0
    %908 = vmatprep.subr.mxu0 0.0
    %909 = vmatpush1.msra.mxu0 0.0
    %910 = vmatprep.subr.mxu0 0.0
    %911 = vmatpush1.msra.mxu0 0.0
    %912 = vmatprep.subr.mxu0 0.0
    %913 = vmatpush1.msra.mxu0 0.0
    %914 = vmatprep.subr.mxu0 0.0
    %915 = vmatpush1.msra.mxu0 0.0
    %916 = vmatprep.subr.mxu0 0.0
    %917 = vmatpush1.msra.mxu0 0.0
    %918 = vmatprep.subr.mxu0 0.0
    %919 = vmatpush1.msra.mxu0 0.0
    %920 = vmatprep.subr.mxu0 0.0
    %921 = vmatpush1.msra.mxu0 0.0
    %922 = vmatprep.subr.mxu0 0.0
    %923 = vmatpush1.msra.mxu0 0.0
    %924 = vmatprep.subr.mxu0 0.0
    %925 = vmatpush1.msra.mxu0 0.0
    %926 = vmatprep.subr.mxu0 0.0
    %927 = vmatpush1.msra.mxu0 0.0
    %928 = vmatprep.subr.mxu0 0.0
    %929 = vmatpush1.msra.mxu0 0.0
    %930 = vmatprep.subr.mxu0 0.0
    %931 = vmatpush1.msra.mxu0 0.0
    %932 = vmatprep.subr.mxu0 0.0
    %933 = vmatpush1.msra.mxu0 0.0
    %934 = vmatprep.subr.mxu0 0.0
    %935 = vmatpush1.msra.mxu0 0.0
    %936 = vmatprep.subr.mxu0 0.0
    %937 = vmatpush1.msra.mxu0 0.0
    %938 = vmatprep.subr.mxu0 0.0
    %939 = vmatpush1.msra.mxu0 0.0
    %940 = vmatprep.subr.mxu0 0.0
    %941 = vmatpush1.msra.mxu0 0.0
    %942 = vmatprep.subr.mxu0 0.0
    %943 = vmatpush1.msra.mxu0 0.0
    %944 = vmatprep.subr.mxu0 0.0
    %945 = vmatpush1.msra.mxu0 0.0
    %946 = vmatprep.subr.mxu0 0.0
    %947 = vmatpush1.msra.mxu0 0.0
    %948 = vmatprep.subr.mxu0 0.0
    %949 = vmatpush1.msra.mxu0 0.0
    %950 = vmatprep.subr.mxu0 0.0
    %951 = vmatpush1.msra.mxu0 0.0
    %952 = vmatprep.subr.mxu0 0.0
    %953 = vmatpush1.msra.mxu0 0.0
    %954 = vmatprep.subr.mxu0 0.0
    %955 = vmatpush1.msra.mxu0 0.0
    %956 = vmatprep.subr.mxu0 0.0
    %957 = vmatpush1.msra.mxu0 0.0
    %958 = vmatprep.subr.mxu0 0.0
    %959 = vmatpush1.msra.mxu0 0.0
    %960 = vmatprep.subr.mxu0 0.0
    %961 = vmatpush1.msra.mxu0 0.0
    %962 = vmatprep.mubr.f32.mxu0 0.0
    %963 = vmatmul.mubr.f32.gmra.mrb[0].mxu0 %v893
    %v964 = vpop.f32.mrb[0].mxu0
    %v965 = vadd.f32 0.0, %v964
    %v966 = vpop.f32.mrb[0].mxu0
    %967 = vmatprep.mubr.f32.mxu0 0.0
    %968 = vmatmul.mubr.f32.gmra.mrb[0].mxu0 %v896
    %v969 = vpop.f32.mrb[0].mxu0
    %v970 = vadd.f32 0.0, %v969
    %v971 = vpop.f32.mrb[0].mxu0
    %972 = vdwg.mxu0
    %v974 = vsel %vm152, %v795, 0
    %v977 = vsel %vm152, %v796, 0
    %v980 = vsel %vm152, %v797, 0
    %v983 = vsel %vm152, %v798, 0
    %985 = vmatprep.subr.mxu0 0.0
    %986 = vmatpush1.msra.mxu0 %v799
    %987 = vmatprep.subr.mxu0 0.0
    %988 = vmatpush1.msra.mxu0 %v800
    %989 = vmatprep.subr.mxu0 0.0
    %990 = vmatpush1.msra.mxu0 %v801
    %991 = vmatprep.subr.mxu0 0.0
    %992 = vmatpush1.msra.mxu0 %v802
    %993 = vmatprep.subr.mxu0 0.0
    %994 = vmatpush1.msra.mxu0 0.0
    %995 = vmatprep.subr.mxu0 0.0
    %996 = vmatpush1.msra.mxu0 0.0
    %997 = vmatprep.subr.mxu0 0.0
    %998 = vmatpush1.msra.mxu0 0.0
    %999 = vmatprep.subr.mxu0 0.0
    %1000 = vmatpush1.msra.mxu0 0.0
    %1001 = vmatprep.subr.mxu0 0.0
    %1002 = vmatpush1.msra.mxu0 0.0
    %1003 = vmatprep.subr.mxu0 0.0
    %1004 = vmatpush1.msra.mxu0 0.0
    %1005 = vmatprep.subr.mxu0 0.0
    %1006 = vmatpush1.msra.mxu0 0.0
    %1007 = vmatprep.subr.mxu0 0.0
    %1008 = vmatpush1.msra.mxu0 0.0
    %1009 = vmatprep.subr.mxu0 0.0
    %1010 = vmatpush1.msra.mxu0 0.0
    %1011 = vmatprep.subr.mxu0 0.0
    %1012 = vmatpush1.msra.mxu0 0.0
    %1013 = vmatprep.subr.mxu0 0.0
    %1014 = vmatpush1.msra.mxu0 0.0
    %1015 = vmatprep.subr.mxu0 0.0
    %1016 = vmatpush1.msra.mxu0 0.0
    %1017 = vmatprep.subr.mxu0 0.0
    %1018 = vmatpush1.msra.mxu0 0.0
    %1019 = vmatprep.subr.mxu0 0.0
    %1020 = vmatpush1.msra.mxu0 0.0
    %1021 = vmatprep.subr.mxu0 0.0
    %1022 = vmatpush1.msra.mxu0 0.0
    %1023 = vmatprep.subr.mxu0 0.0
    %1024 = vmatpush1.msra.mxu0 0.0
    %1025 = vmatprep.subr.mxu0 0.0
    %1026 = vmatpush1.msra.mxu0 0.0
    %1027 = vmatprep.subr.mxu0 0.0
    %1028 = vmatpush1.msra.mxu0 0.0
    %1029 = vmatprep.subr.mxu0 0.0
    %1030 = vmatpush1.msra.mxu0 0.0
    %1031 = vmatprep.subr.mxu0 0.0
    %1032 = vmatpush1.msra.mxu0 0.0
    %1033 = vmatprep.subr.mxu0 0.0
    %1034 = vmatpush1.msra.mxu0 0.0
    %1035 = vmatprep.subr.mxu0 0.0
    %1036 = vmatpush1.msra.mxu0 0.0
    %1037 = vmatprep.subr.mxu0 0.0
    %1038 = vmatpush1.msra.mxu0 0.0
    %1039 = vmatprep.subr.mxu0 0.0
    %1040 = vmatpush1.msra.mxu0 0.0
    %1041 = vmatprep.subr.mxu0 0.0
    %1042 = vmatpush1.msra.mxu0 0.0
    %1043 = vmatprep.subr.mxu0 0.0
    %1044 = vmatpush1.msra.mxu0 0.0
    %1045 = vmatprep.subr.mxu0 0.0
    %1046 = vmatpush1.msra.mxu0 0.0
    %1047 = vmatprep.subr.mxu0 0.0
    %1048 = vmatpush1.msra.mxu0 0.0
    %1049 = vmatprep.mubr.f32.mxu0 0.0
    %1050 = vmatmul.mubr.f32.gmra.mrb[0].mxu0 %v974
    %v1051 = vpop.f32.mrb[0].mxu0
    %v1052 = vadd.f32 1e-06, %v1051
    %v1053 = vpop.f32.mrb[0].mxu0
    %1054 = vmatprep.mubr.f32.mxu0 0.0
    %1055 = vmatmul.mubr.f32.gmra.mrb[0].mxu0 %v977
    %v1056 = vpop.f32.mrb[0].mxu0
    %v1057 = vadd.f32 1e-06, %v1056
    %v1058 = vpop.f32.mrb[0].mxu0
    %1059 = vmatprep.mubr.f32.mxu0 0.0
    %1060 = vmatmul.mubr.f32.gmra.mrb[0].mxu0 %v980
    %v1061 = vpop.f32.mrb[0].mxu0
    %v1062 = vadd.f32 1e-06, %v1061
    %v1063 = vpop.f32.mrb[0].mxu0
    %1064 = vmatprep.mubr.f32.mxu0 0.0
    %1065 = vmatmul.mubr.f32.gmra.mrb[0].mxu0 %v983
    %v1066 = vpop.f32.mrb[0].mxu0
    %v1067 = vadd.f32 1e-06, %v1066
    %v1068 = vpop.f32.mrb[0].mxu0
    %1069 = vdwg.mxu0
    %v1070 = vrcp.pop %v1052
    %v1071 = vrcp.pop %v1057
    %v1072 = vrcp.pop %v1062
    %v1073 = vrcp.pop %v1067
    %v1074 = vmul.f32 %v884, %v1070
    %v1075 = vmul.f32 %v889, %v1071
    %v1076 = vmul.f32 %v965, %v1072
    %v1077 = vmul.f32 %v970, %v1073
    %v1078 = vld [vmem:[#allocation13] sm:$0xff]
    %v1079 = vld [vmem:[#allocation13 + $0x8] sm:$0xff]
    %v1080 = vld [vmem:[#allocation13 + $0x10] sm:$0xff]
    %v1081 = vld [vmem:[#allocation13 + $0x18] sm:$0xff]
    %v1082 = vld [vmem:[#allocation14] sm:$0x1]
    %v1084 = vlaneseq
    %v1085 = vshrl.u32 %v1084, 7
    %v1086 = vsub.s32 0, %v1085
    %v1087 = vrot.slane %v1082, %v1086
    %v1090 = vsel %vm152, %v1074, 0
    %v1093 = vsel %vm152, %v1075, 0
    %v1096 = vsel %vm152, %v1076, 0
    %v1099 = vsel %vm152, %v1077, 0
    %1101 = vmatprep.subr.mxu0 0.0
    %1102 = vmatpush1.msra.mxu0 %v1078
    %1103 = vmatprep.subr.mxu0 0.0
    %1104 = vmatpush1.msra.mxu0 %v1079
    %1105 = vmatprep.subr.mxu0 0.0
    %1106 = vmatpush1.msra.mxu0 %v1080
    %1107 = vmatprep.subr.mxu0 0.0
    %1108 = vmatpush1.msra.mxu0 %v1081
    %1109 = vmatprep.subr.mxu0 0.0
    %1110 = vmatpush1.msra.mxu0 0.0
    %1111 = vmatprep.subr.mxu0 0.0
    %1112 = vmatpush1.msra.mxu0 0.0
    %1113 = vmatprep.subr.mxu0 0.0
    %1114 = vmatpush1.msra.mxu0 0.0
    %1115 = vmatprep.subr.mxu0 0.0
    %1116 = vmatpush1.msra.mxu0 0.0
    %1117 = vmatprep.subr.mxu0 0.0
    %1118 = vmatpush1.msra.mxu0 0.0
    %1119 = vmatprep.subr.mxu0 0.0
    %1120 = vmatpush1.msra.mxu0 0.0
    %1121 = vmatprep.subr.mxu0 0.0
    %1122 = vmatpush1.msra.mxu0 0.0
    %1123 = vmatprep.subr.mxu0 0.0
    %1124 = vmatpush1.msra.mxu0 0.0
    %1125 = vmatprep.subr.mxu0 0.0
    %1126 = vmatpush1.msra.mxu0 0.0
    %1127 = vmatprep.subr.mxu0 0.0
    %1128 = vmatpush1.msra.mxu0 0.0
    %1129 = vmatprep.subr.mxu0 0.0
    %1130 = vmatpush1.msra.mxu0 0.0
    %1131 = vmatprep.subr.mxu0 0.0
    %1132 = vmatpush1.msra.mxu0 0.0
    %1133 = vmatprep.subr.mxu0 0.0
    %1134 = vmatpush1.msra.mxu0 0.0
    %1135 = vmatprep.subr.mxu0 0.0
    %1136 = vmatpush1.msra.mxu0 0.0
    %1137 = vmatprep.subr.mxu0 0.0
    %1138 = vmatpush1.msra.mxu0 0.0
    %1139 = vmatprep.subr.mxu0 0.0
    %1140 = vmatpush1.msra.mxu0 0.0
    %1141 = vmatprep.subr.mxu0 0.0
    %1142 = vmatpush1.msra.mxu0 0.0
    %1143 = vmatprep.subr.mxu0 0.0
    %1144 = vmatpush1.msra.mxu0 0.0
    %1145 = vmatprep.subr.mxu0 0.0
    %1146 = vmatpush1.msra.mxu0 0.0
    %1147 = vmatprep.subr.mxu0 0.0
    %1148 = vmatpush1.msra.mxu0 0.0
    %1149 = vmatprep.subr.mxu0 0.0
    %1150 = vmatpush1.msra.mxu0 0.0
    %1151 = vmatprep.subr.mxu0 0.0
    %1152 = vmatpush1.msra.mxu0 0.0
    %1153 = vmatprep.subr.mxu0 0.0
    %1154 = vmatpush1.msra.mxu0 0.0
    %1155 = vmatprep.subr.mxu0 0.0
    %1156 = vmatpush1.msra.mxu0 0.0
    %1157 = vmatprep.subr.mxu0 0.0
    %1158 = vmatpush1.msra.mxu0 0.0
    %1159 = vmatprep.subr.mxu0 0.0
    %1160 = vmatpush1.msra.mxu0 0.0
    %1161 = vmatprep.subr.mxu0 0.0
    %1162 = vmatpush1.msra.mxu0 0.0
    %1163 = vmatprep.subr.mxu0 0.0
    %1164 = vmatpush1.msra.mxu0 0.0
    %1165 = vmatprep.mubr.f32.mxu0 0.0
    %1166 = vmatmul.mubr.f32.gmra.mrb[0].mxu0 %v1090
    %v1167 = vpop.f32.mrb[0].mxu0
    %v1168 = vadd.f32 %v1087, %v1167
    %v1169 = vpop.f32.mrb[0].mxu0
    %1170 = vmatprep.mubr.f32.mxu0 0.0
    %1171 = vmatmul.mubr.f32.gmra.mrb[0].mxu0 %v1093
    %v1172 = vpop.f32.mrb[0].mxu0
    %v1173 = vadd.f32 %v1087, %v1172
    %v1174 = vpop.f32.mrb[0].mxu0
    %1175 = vmatprep.mubr.f32.mxu0 0.0
    %1176 = vmatmul.mubr.f32.gmra.mrb[0].mxu0 %v1096
    %v1177 = vpop.f32.mrb[0].mxu0
    %v1178 = vadd.f32 %v1087, %v1177
    %v1179 = vpop.f32.mrb[0].mxu0
    %1180 = vmatprep.mubr.f32.mxu0 0.0
    %1181 = vmatmul.mubr.f32.gmra.mrb[0].mxu0 %v1099
    %v1182 = vpop.f32.mrb[0].mxu0
    %v1183 = vadd.f32 %v1087, %v1182
    %v1184 = vpop.f32.mrb[0].mxu0
    %1185 = vdwg.mxu0
    %1186 = vst.msk [vmem:[#allocation16] sm:$0xff] %vm152, %v1168
    %1187 = vst.msk [vmem:[#allocation16 + $0x8] sm:$0xff] %vm152, %v1173
    %1188 = vst.msk [vmem:[#allocation16 + $0x10] sm:$0xff] %vm152, %v1178
    %1189 = vst.msk [vmem:[#allocation16 + $0x18] sm:$0xff] %vm152, %v1183
    // Predicated region
    $region66: #{tpu_custom_call.1} parent=1 // pred_check
      _
    $region67: #{tpu_custom_call.1} parent=1 // pred_check_branch
      %1191 = sbr.rel (0) target = $region69
    $region68: #{tpu_custom_call.1} parent=1 // pred_region
      %s1193 = ssub.s32 512, 512
      %1194 = vsyncadd [#allocation4], %s1193
      %s1195 = sshll.u32 [#allocation16], 4
      %s1196 = int_to_ptr.vmem [resolvable:$true] %s1195
      %1201 = dma.vmem_to_hbm [thread:$0]  %s1196, 512, %s8, [#allocation4], 128, 128, 8
    $region69: #{tpu_custom_call.1} parent=1 // pred_fallthru
      _
    // Predicated region
    $region70: #{tpu_custom_call.1} parent=1 // pred_check
      _
    $region71: #{tpu_custom_call.1} parent=1 // pred_check_branch
      %1203 = sbr.rel (0) target = $region73
    $region72: #{tpu_custom_call.1} parent=1 // pred_region
      %1204 = dma.done [#allocation4], 512
    $region73: #{tpu_custom_call.1} parent=1 // pred_fallthru
      _
    %1205 = vsyncpa [#allocation3], 1
    %1206 = vsyncpa [#allocation6], 1
    %1207 = vsyncpa [#allocation9], 1
    %1208 = vsyncpa [#allocation12], 1
    %1209 = vsyncpa [#allocation15], 1
    %1210 = vsyncpa [#allocation4], 1

// kernel: tpu_custom_call.1
$region0: #{tpu_custom_call.1}
  #allocation0 [shape = 'u32[]', space=smem, size = 0x4, offset = 0x4, fixed_abs, tag = 'smem constant byte address 0x4 - core index']
  #allocation1 [shape = 'u32[144,128]{1,0:T(1,128)}', space=vmem, size = 0x12000, scoped, tag = 'internal scratch']
  %s0 = inlined_call_operand.hbm [shape: f32[2,16,32], index: 0, kind: input, shape index: {}]
  %s1 = inlined_call_operand.hbm [shape: f32[2,16,32], index: 1, kind: input, shape index: {}]
  %s2 = inlined_call_operand.hbm [shape: f32[2,16,32], index: 2, kind: input, shape index: {}]
  %s3 = inlined_call_operand.hbm [shape: f32[3,32,32], index: 3, kind: input, shape index: {}]
  %s4 = inlined_call_operand.hbm [shape: f32[3,1,32], index: 4, kind: input, shape index: {}]
  %s5 = inlined_call_operand.hbm [shape: f32[32,32], index: 5, kind: input, shape index: {}]
  %s6 = inlined_call_operand.hbm [shape: f32[32,32], index: 6, kind: input, shape index: {}]
  %s7 = inlined_call_operand.hbm [shape: f32[1,32], index: 7, kind: input, shape index: {}]
  %s8 = inlined_call_operand.hbm [shape: f32[2,16,32], index: 8, kind: output, shape index: {}]
  %s9 = sld [smem:[#allocation0]]
  $region74: #{tpu_custom_call.1} parent=0
    _
  %s11 = ssub.s32 1, %s9
  %s12 = scalar_select 0, %s11, %s9
  $region1: #{tpu_custom_call.1} parent=0
    #allocation2 [shape = 'u8[16384]{0}', space=vmem, size = 0x4000, scoped, tag = 'input window, operand 0, single buffered']
    #allocation3 [shape = 's32[1]{0}', space=sflag, size = 0x4, scoped, tag = 'scoped memory for tpu_custom_call.1']
    #allocation4 [shape = 's32[1]{0}', space=sflag, size = 0x4, scoped, tag = 'scoped memory for tpu_custom_call.1']
    #allocation5 [shape = 'u8[16384]{0}', space=vmem, size = 0x4000, scoped, tag = 'input window, operand 1, single buffered']
    #allocation6 [shape = 's32[1]{0}', space=sflag, size = 0x4, scoped, tag = 'scoped memory for tpu_custom_call.1']
    #allocation7 [shape = 'u8[16384]{0}', space=vmem, size = 0x4000, scoped, tag = 'input window, operand 2, single buffered']
    #allocation8 [shape = 'u8[49152]{0}', space=vmem, size = 0xc000, scoped, tag = 'input window, operand 3, single buffered']
    #allocation9 [shape = 's32[1]{0}', space=sflag, size = 0x4, scoped, tag = 'scoped memory for tpu_custom_call.1']
    #allocation10 [shape = 'u8[1536]{0}', space=vmem, size = 0x800, scoped, tag = 'input window, operand 4, single buffered']
    #allocation11 [shape = 'u8[16384]{0}', space=vmem, size = 0x4000, scoped, tag = 'input window, operand 5, single buffered']
    #allocation12 [shape = 's32[1]{0}', space=sflag, size = 0x4, scoped, tag = 'scoped memory for tpu_custom_call.1']
    #allocation13 [shape = 'u8[16384]{0}', space=vmem, size = 0x4000, scoped, tag = 'input window, operand 6, single buffered']
    #allocation14 [shape = 'u8[512]{0}', space=vmem, size = 0x400, scoped, tag = 'input window, operand 7, single buffered']
    #allocation15 [shape = 's32[1]{0}', space=sflag, size = 0x4, scoped, tag = 'scoped memory for tpu_custom_call.1']
    #allocation16 [shape = 'u8[16384]{0}', space=vmem, size = 0x4000, scoped, tag = 'output window, operand 0, single buffered']
    %13 = vsyncpa [#allocation3], 0
    %14 = vsyncpa [#allocation6], 0
    %15 = vsyncpa [#allocation9], 0
    %16 = vsyncpa [#allocation12], 0
    %17 = vsyncpa [#allocation15], 0
    %18 = vsyncpa [#allocation4], 0
    // Predicated region
    $region2: #{tpu_custom_call.1} parent=1 // pred_check
      _
    $region3: #{tpu_custom_call.1} parent=1 // pred_check_branch
      %20 = sbr.rel (0) target = $region5
    $region4: #{tpu_custom_call.1} parent=1 // pred_region
      %s22 = ssub.s32 512, 512
      %23 = vsyncadd [#allocation3], %s22
      %s24 = sshll.u32 [#allocation2], 4
      %s25 = int_to_ptr.vmem [resolvable:$true] %s24
      %30 = dma.hbm_to_vmem [thread:$0]  %s0, 512, %s25, [#allocation3], 128, 128, 8
    $region5: #{tpu_custom_call.1} parent=1 // pred_fallthru
      _
    // Predicated region
    $region6: #{tpu_custom_call.1} parent=1 // pred_check
      _
    $region7: #{tpu_custom_call.1} parent=1 // pred_check_branch
      %32 = sbr.rel (0) target = $region9
    $region8: #{tpu_custom_call.1} parent=1 // pred_region
      %s34 = ssub.s32 512, 512
      %35 = vsyncadd [#allocation6], %s34
      %s36 = sshll.u32 [#allocation5], 4
      %s37 = int_to_ptr.vmem [resolvable:$true] %s36
      %42 = dma.hbm_to_vmem [thread:$0]  %s1, 512, %s37, [#allocation6], 128, 128, 8
    $region9: #{tpu_custom_call.1} parent=1 // pred_fallthru
      _
    // Predicated region
    $region10: #{tpu_custom_call.1} parent=1 // pred_check
      _
    $region11: #{tpu_custom_call.1} parent=1 // pred_check_branch
      %44 = sbr.rel (0) target = $region13
    $region12: #{tpu_custom_call.1} parent=1 // pred_region
      %s46 = ssub.s32 512, 512
      %47 = vsyncadd [#allocation6], %s46
      %s48 = sshll.u32 [#allocation7], 4
      %s49 = int_to_ptr.vmem [resolvable:$true] %s48
      %54 = dma.hbm_to_vmem [thread:$0]  %s2, 512, %s49, [#allocation6], 128, 128, 8
    $region13: #{tpu_custom_call.1} parent=1 // pred_fallthru
      _
    // Predicated region
    $region14: #{tpu_custom_call.1} parent=1 // pred_check
      _
    $region15: #{tpu_custom_call.1} parent=1 // pred_check_branch
      %56 = sbr.rel (0) target = $region17
    $region16: #{tpu_custom_call.1} parent=1 // pred_region
      %s58 = ssub.s32 1536, 1536
      %59 = vsyncadd [#allocation9], %s58
      %s60 = sshll.u32 [#allocation8], 4
      %s61 = int_to_ptr.vmem [resolvable:$true] %s60
      %66 = dma.hbm_to_vmem [thread:$0]  %s3, 1536, %s61, [#allocation9], 128, 128, 8
    $region17: #{tpu_custom_call.1} parent=1 // pred_fallthru
      _
    // Predicated region
    $region18: #{tpu_custom_call.1} parent=1 // pred_check
      _
    $region19: #{tpu_custom_call.1} parent=1 // pred_check_branch
      %68 = sbr.rel (0) target = $region21
    $region20: #{tpu_custom_call.1} parent=1 // pred_region
      %s70 = ssub.s32 48, 48
      %71 = vsyncadd [#allocation9], %s70
      %s72 = sshll.u32 [#allocation10], 4
      %s73 = int_to_ptr.vmem [resolvable:$true] %s72
      %78 = dma.hbm_to_vmem [thread:$0]  %s4, 48, %s73, [#allocation9], 16, 16, 1
    $region21: #{tpu_custom_call.1} parent=1 // pred_fallthru
      _
    // Predicated region
    $region22: #{tpu_custom_call.1} parent=1 // pred_check
      _
    $region23: #{tpu_custom_call.1} parent=1 // pred_check_branch
      %80 = sbr.rel (0) target = $region25
    $region24: #{tpu_custom_call.1} parent=1 // pred_region
      %s82 = ssub.s32 512, 512
      %83 = vsyncadd [#allocation12], %s82
      %s84 = sshll.u32 [#allocation11], 4
      %s85 = int_to_ptr.vmem [resolvable:$true] %s84
      %90 = dma.hbm_to_vmem [thread:$0]  %s5, 512, %s85, [#allocation12], 128, 128, 8
    $region25: #{tpu_custom_call.1} parent=1 // pred_fallthru
      _
    // Predicated region
    $region26: #{tpu_custom_call.1} parent=1 // pred_check
      _
    $region27: #{tpu_custom_call.1} parent=1 // pred_check_branch
      %92 = sbr.rel (0) target = $region29
    $region28: #{tpu_custom_call.1} parent=1 // pred_region
      %s94 = ssub.s32 512, 512
      %95 = vsyncadd [#allocation12], %s94
      %s96 = sshll.u32 [#allocation13], 4
      %s97 = int_to_ptr.vmem [resolvable:$true] %s96
      %102 = dma.hbm_to_vmem [thread:$0]  %s6, 512, %s97, [#allocation12], 128, 128, 8
    $region29: #{tpu_custom_call.1} parent=1 // pred_fallthru
      _
    // Predicated region
    $region30: #{tpu_custom_call.1} parent=1 // pred_check
      _
    $region31: #{tpu_custom_call.1} parent=1 // pred_check_branch
      %104 = sbr.rel (0) target = $region33
    $region32: #{tpu_custom_call.1} parent=1 // pred_region
      %s106 = ssub.s32 16, 16
      %107 = vsyncadd [#allocation15], %s106
      %s109 = sshll.u32 [#allocation14], 4
      %s110 = int_to_ptr.vmem [resolvable:$true] %s109
      %112 = dma.hbm_to_vmem [thread:$0]  %s7, 16, %s110, [#allocation15]
    $region33: #{tpu_custom_call.1} parent=1 // pred_fallthru
      _
    // Predicated region
    $region34: #{tpu_custom_call.1} parent=1 // pred_check
      _
    $region35: #{tpu_custom_call.1} parent=1 // pred_check_branch
      %114 = sbr.rel (0) target = $region37
    $region36: #{tpu_custom_call.1} parent=1 // pred_region
      %115 = dma.done [#allocation3], 512
    $region37: #{tpu_custom_call.1} parent=1 // pred_fallthru
      _
    // Predicated region
    $region38: #{tpu_custom_call.1} parent=1 // pred_check
      _
    $region39: #{tpu_custom_call.1} parent=1 // pred_check_branch
      %117 = sbr.rel (0) target = $region41
    $region40: #{tpu_custom_call.1} parent=1 // pred_region
      %118 = dma.done [#allocation6], 512
    $region41: #{tpu_custom_call.1} parent=1 // pred_fallthru
      _
    // Predicated region
    $region42: #{tpu_custom_call.1} parent=1 // pred_check
      _
    $region43: #{tpu_custom_call.1} parent=1 // pred_check_branch
      %120 = sbr.rel (0) target = $region45
    $region44: #{tpu_custom_call.1} parent=1 // pred_region
      %121 = dma.done [#allocation6], 512
    $region45: #{tpu_custom_call.1} parent=1 // pred_fallthru
      _
    // Predicated region
    $region46: #{tpu_custom_call.1} parent=1 // pred_check
      _
    $region47: #{tpu_custom_call.1} parent=1 // pred_check_branch
      %123 = sbr.rel (0) target = $region49
    $region48: #{tpu_custom_call.1} parent=1 // pred_region
      %124 = dma.done [#allocation9], 1536
    $region49: #{tpu_custom_call.1} parent=1 // pred_fallthru
      _
    // Predicated region
    $region50: #{tpu_custom_call.1} parent=1 // pred_check
      _
    $region51: #{tpu_custom_call.1} parent=1 // pred_check_branch
      %126 = sbr.rel (0) target = $region53
    $region52: #{tpu_custom_call.1} parent=1 // pred_region
      %127 = dma.done [#allocation9], 48
    $region53: #{tpu_custom_call.1} parent=1 // pred_fallthru
      _
    // Predicated region
    $region54: #{tpu_custom_call.1} parent=1 // pred_check
      _
    $region55: #{tpu_custom_call.1} parent=1 // pred_check_branch
      %129 = sbr.rel (0) target = $region57
    $region56: #{tpu_custom_call.1} parent=1 // pred_region
      %130 = dma.done [#allocation12], 512
    $region57: #{tpu_custom_call.1} parent=1 // pred_fallthru
      _
    // Predicated region
    $region58: #{tpu_custom_call.1} parent=1 // pred_check
      _
    $region59: #{tpu_custom_call.1} parent=1 // pred_check_branch
      %132 = sbr.rel (0) target = $region61
    $region60: #{tpu_custom_call.1} parent=1 // pred_region
      %133 = dma.done [#allocation12], 512
    $region61: #{tpu_custom_call.1} parent=1 // pred_fallthru
      _
    // Predicated region
    $region62: #{tpu_custom_call.1} parent=1 // pred_check
      _
    $region63: #{tpu_custom_call.1} parent=1 // pred_check_branch
      %135 = sbr.rel (0) target = $region65
    $region64: #{tpu_custom_call.1} parent=1 // pred_region
      %136 = dma.done [#allocation15], 16
    $region65: #{tpu_custom_call.1} parent=1 // pred_fallthru
      _
    %v137 = vld [vmem:[#allocation2] sm:$0xff]
    %v138 = vld [vmem:[#allocation2 + $0x8] sm:$0xff]
    %v139 = vld [vmem:[#allocation2 + $0x10] sm:$0xff]
    %v140 = vld [vmem:[#allocation2 + $0x18] sm:$0xff]
    %v141 = vld [vmem:[#allocation8] sm:$0xff]
    %v142 = vld [vmem:[#allocation8 + $0x8] sm:$0xff]
    %v143 = vld [vmem:[#allocation8 + $0x10] sm:$0xff]
    %v144 = vld [vmem:[#allocation8 + $0x18] sm:$0xff]
    %v145 = vld [vmem:[#allocation10] sm:$0x1]
    %v147 = vlaneseq
    %v148 = vshrl.u32 %v147, 7
    %v149 = vsub.s32 0, %v148
    %v150 = vrot.slane %v145, %v149
    %vm152 = vcmask 261120
    %v154 = vsel %vm152, %v137, 0
    %v157 = vsel %vm152, %v138, 0
    %v160 = vsel %vm152, %v139, 0
    %v163 = vsel %vm152, %v140, 0
    %165 = vmatprep.subr.mxu0 0.0
    %166 = vmatpush1.msra.mxu0 %v141
    %167 = vmatprep.subr.mxu0 0.0
    %168 = vmatpush1.msra.mxu0 %v142
    %169 = vmatprep.subr.mxu0 0.0
    %170 = vmatpush1.msra.mxu0 %v143
    %171 = vmatprep.subr.mxu0 0.0
    %172 = vmatpush1.msra.mxu0 %v144
    %173 = vmatprep.subr.mxu0 0.0
    %174 = vmatpush1.msra.mxu0 0.0
    %175 = vmatprep.subr.mxu0 0.0
    %176 = vmatpush1.msra.mxu0 0.0
    %177 = vmatprep.subr.mxu0 0.0
    %178 = vmatpush1.msra.mxu0 0.0
    %179 = vmatprep.subr.mxu0 0.0
    %180 = vmatpush1.msra.mxu0 0.0
    %181 = vmatprep.subr.mxu0 0.0
    %182 = vmatpush1.msra.mxu0 0.0
    %183 = vmatprep.subr.mxu0 0.0
    %184 = vmatpush1.msra.mxu0 0.0
    %185 = vmatprep.subr.mxu0 0.0
    %186 = vmatpush1.msra.mxu0 0.0
    %187 = vmatprep.subr.mxu0 0.0
    %188 = vmatpush1.msra.mxu0 0.0
    %189 = vmatprep.subr.mxu0 0.0
    %190 = vmatpush1.msra.mxu0 0.0
    %191 = vmatprep.subr.mxu0 0.0
    %192 = vmatpush1.msra.mxu0 0.0
    %193 = vmatprep.subr.mxu0 0.0
    %194 = vmatpush1.msra.mxu0 0.0
    %195 = vmatprep.subr.mxu0 0.0
    %196 = vmatpush1.msra.mxu0 0.0
    %197 = vmatprep.subr.mxu0 0.0
    %198 = vmatpush1.msra.mxu0 0.0
    %199 = vmatprep.subr.mxu0 0.0
    %200 = vmatpush1.msra.mxu0 0.0
    %201 = vmatprep.subr.mxu0 0.0
    %202 = vmatpush1.msra.mxu0 0.0
    %203 = vmatprep.subr.mxu0 0.0
    %204 = vmatpush1.msra.mxu0 0.0
    %205 = vmatprep.subr.mxu0 0.0
    %206 = vmatpush1.msra.mxu0 0.0
    %207 = vmatprep.subr.mxu0 0.0
    %208 = vmatpush1.msra.mxu0 0.0
    %209 = vmatprep.subr.mxu0 0.0
    %210 = vmatpush1.msra.mxu0 0.0
    %211 = vmatprep.subr.mxu0 0.0
    %212 = vmatpush1.msra.mxu0 0.0
    %213 = vmatprep.subr.mxu0 0.0
    %214 = vmatpush1.msra.mxu0 0.0
    %215 = vmatprep.subr.mxu0 0.0
    %216 = vmatpush1.msra.mxu0 0.0
    %217 = vmatprep.subr.mxu0 0.0
    %218 = vmatpush1.msra.mxu0 0.0
    %219 = vmatprep.subr.mxu0 0.0
    %220 = vmatpush1.msra.mxu0 0.0
    %221 = vmatprep.subr.mxu0 0.0
    %222 = vmatpush1.msra.mxu0 0.0
    %223 = vmatprep.subr.mxu0 0.0
    %224 = vmatpush1.msra.mxu0 0.0
    %225 = vmatprep.subr.mxu0 0.0
    %226 = vmatpush1.msra.mxu0 0.0
    %227 = vmatprep.subr.mxu0 0.0
    %228 = vmatpush1.msra.mxu0 0.0
    %229 = vmatprep.mubr.f32.mxu0 0.0
    %230 = vmatmul.mubr.f32.gmra.mrb[0].mxu0 %v154
    %v231 = vpop.f32.mrb[0].mxu0
    %v232 = vadd.f32 %v150, %v231
    %v233 = vpop.f32.mrb[0].mxu0
    %234 = vmatprep.mubr.f32.mxu0 0.0
    %235 = vmatmul.mubr.f32.gmra.mrb[0].mxu0 %v157
    %v236 = vpop.f32.mrb[0].mxu0
    %v237 = vadd.f32 %v150, %v236
    %v238 = vpop.f32.mrb[0].mxu0
    %239 = vmatprep.mubr.f32.mxu0 0.0
    %240 = vmatmul.mubr.f32.gmra.mrb[0].mxu0 %v160
    %v241 = vpop.f32.mrb[0].mxu0
    %v242 = vadd.f32 %v150, %v241
    %v243 = vpop.f32.mrb[0].mxu0
    %244 = vmatprep.mubr.f32.mxu0 0.0
    %245 = vmatmul.mubr.f32.gmra.mrb[0].mxu0 %v163
    %v246 = vpop.f32.mrb[0].mxu0
    %v247 = vadd.f32 %v150, %v246
    %v248 = vpop.f32.mrb[0].mxu0
    %249 = vdwg.mxu0
    %v250 = vld [vmem:[#allocation5] sm:$0xff]
    %v251 = vld [vmem:[#allocation5 + $0x8] sm:$0xff]
    %v252 = vld [vmem:[#allocation5 + $0x10] sm:$0xff]
    %v253 = vld [vmem:[#allocation5 + $0x18] sm:$0xff]
    %s254 = scalar_lea.vmem [#allocation8], 32
    %v255 = vld [vmem:[%s254] sm:$0xff]
    %v256 = vld [vmem:[%s254 + $0x8] sm:$0xff]
    %v257 = vld [vmem:[%s254 + $0x10] sm:$0xff]
    %v258 = vld [vmem:[%s254 + $0x18] sm:$0xff]
    %s259 = scalar_lea.vmem [#allocation10], 1
    %v260 = vld [vmem:[%s259] sm:$0x1]
    %v262 = vlaneseq
    %v263 = vshrl.u32 %v262, 7
    %v264 = vsub.s32 0, %v263
    %v265 = vrot.slane %v260, %v264
    %v268 = vsel %vm152, %v250, 0
    %v271 = vsel %vm152, %v251, 0
    %v274 = vsel %vm152, %v252, 0
    %v277 = vsel %vm152, %v253, 0
    %279 = vmatprep.subr.mxu0 0.0
    %280 = vmatpush1.msra.mxu0 %v255
    %281 = vmatprep.subr.mxu0 0.0
    %282 = vmatpush1.msra.mxu0 %v256
    %283 = vmatprep.subr.mxu0 0.0
    %284 = vmatpush1.msra.mxu0 %v257
    %285 = vmatprep.subr.mxu0 0.0
    %286 = vmatpush1.msra.mxu0 %v258
    %287 = vmatprep.subr.mxu0 0.0
    %288 = vmatpush1.msra.mxu0 0.0
    %289 = vmatprep.subr.mxu0 0.0
    %290 = vmatpush1.msra.mxu0 0.0
    %291 = vmatprep.subr.mxu0 0.0
    %292 = vmatpush1.msra.mxu0 0.0
    %293 = vmatprep.subr.mxu0 0.0
    %294 = vmatpush1.msra.mxu0 0.0
    %295 = vmatprep.subr.mxu0 0.0
    %296 = vmatpush1.msra.mxu0 0.0
    %297 = vmatprep.subr.mxu0 0.0
    %298 = vmatpush1.msra.mxu0 0.0
    %299 = vmatprep.subr.mxu0 0.0
    %300 = vmatpush1.msra.mxu0 0.0
    %301 = vmatprep.subr.mxu0 0.0
    %302 = vmatpush1.msra.mxu0 0.0
    %303 = vmatprep.subr.mxu0 0.0
    %304 = vmatpush1.msra.mxu0 0.0
    %305 = vmatprep.subr.mxu0 0.0
    %306 = vmatpush1.msra.mxu0 0.0
    %307 = vmatprep.subr.mxu0 0.0
    %308 = vmatpush1.msra.mxu0 0.0
    %309 = vmatprep.subr.mxu0 0.0
    %310 = vmatpush1.msra.mxu0 0.0
    %311 = vmatprep.subr.mxu0 0.0
    %312 = vmatpush1.msra.mxu0 0.0
    %313 = vmatprep.subr.mxu0 0.0
    %314 = vmatpush1.msra.mxu0 0.0
    %315 = vmatprep.subr.mxu0 0.0
    %316 = vmatpush1.msra.mxu0 0.0
    %317 = vmatprep.subr.mxu0 0.0
    %318 = vmatpush1.msra.mxu0 0.0
    %319 = vmatprep.subr.mxu0 0.0
    %320 = vmatpush1.msra.mxu0 0.0
    %321 = vmatprep.subr.mxu0 0.0
    %322 = vmatpush1.msra.mxu0 0.0
    %323 = vmatprep.subr.mxu0 0.0
    %324 = vmatpush1.msra.mxu0 0.0
    %325 = vmatprep.subr.mxu0 0.0
    %326 = vmatpush1.msra.mxu0 0.0
    %327 = vmatprep.subr.mxu0 0.0
    %328 = vmatpush1.msra.mxu0 0.0
    %329 = vmatprep.subr.mxu0 0.0
    %330 = vmatpush1.msra.mxu0 0.0
    %331 = vmatprep.subr.mxu0 0.0
    %332 = vmatpush1.msra.mxu0 0.0
    %333 = vmatprep.subr.mxu0 0.0
    %334 = vmatpush1.msra.mxu0 0.0
    %335 = vmatprep.subr.mxu0 0.0
    %336 = vmatpush1.msra.mxu0 0.0
    %337 = vmatprep.subr.mxu0 0.0
    %338 = vmatpush1.msra.mxu0 0.0
    %339 = vmatprep.subr.mxu0 0.0
    %340 = vmatpush1.msra.mxu0 0.0
    %341 = vmatprep.subr.mxu0 0.0
    %342 = vmatpush1.msra.mxu0 0.0
    %343 = vmatprep.mubr.f32.mxu0 0.0
    %344 = vmatmul.mubr.f32.gmra.mrb[0].mxu0 %v268
    %v345 = vpop.f32.mrb[0].mxu0
    %v346 = vadd.f32 %v265, %v345
    %v347 = vpop.f32.mrb[0].mxu0
    %348 = vmatprep.mubr.f32.mxu0 0.0
    %349 = vmatmul.mubr.f32.gmra.mrb[0].mxu0 %v271
    %v350 = vpop.f32.mrb[0].mxu0
    %v351 = vadd.f32 %v265, %v350
    %v352 = vpop.f32.mrb[0].mxu0
    %353 = vmatprep.mubr.f32.mxu0 0.0
    %354 = vmatmul.mubr.f32.gmra.mrb[0].mxu0 %v274
    %v355 = vpop.f32.mrb[0].mxu0
    %v356 = vadd.f32 %v265, %v355
    %v357 = vpop.f32.mrb[0].mxu0
    %358 = vmatprep.mubr.f32.mxu0 0.0
    %359 = vmatmul.mubr.f32.gmra.mrb[0].mxu0 %v277
    %v360 = vpop.f32.mrb[0].mxu0
    %v361 = vadd.f32 %v265, %v360
    %v362 = vpop.f32.mrb[0].mxu0
    %363 = vdwg.mxu0
    %v364 = vld [vmem:[#allocation7] sm:$0xff]
    %v365 = vld [vmem:[#allocation7 + $0x8] sm:$0xff]
    %v366 = vld [vmem:[#allocation7 + $0x10] sm:$0xff]
    %v367 = vld [vmem:[#allocation7 + $0x18] sm:$0xff]
    %s368 = scalar_lea.vmem [#allocation8], 64
    %v369 = vld [vmem:[%s368] sm:$0xff]
    %v370 = vld [vmem:[%s368 + $0x8] sm:$0xff]
    %v371 = vld [vmem:[%s368 + $0x10] sm:$0xff]
    %v372 = vld [vmem:[%s368 + $0x18] sm:$0xff]
    %s373 = scalar_lea.vmem [#allocation10], 2
    %v374 = vld [vmem:[%s373] sm:$0x1]
    %v376 = vlaneseq
    %v377 = vshrl.u32 %v376, 7
    %v378 = vsub.s32 0, %v377
    %v379 = vrot.slane %v374, %v378
    %v382 = vsel %vm152, %v364, 0
    %v385 = vsel %vm152, %v365, 0
    %v388 = vsel %vm152, %v366, 0
    %v391 = vsel %vm152, %v367, 0
    %393 = vmatprep.subr.mxu0 0.0
    %394 = vmatpush1.msra.mxu0 %v369
    %395 = vmatprep.subr.mxu0 0.0
    %396 = vmatpush1.msra.mxu0 %v370
    %397 = vmatprep.subr.mxu0 0.0
    %398 = vmatpush1.msra.mxu0 %v371
    %399 = vmatprep.subr.mxu0 0.0
    %400 = vmatpush1.msra.mxu0 %v372
    %401 = vmatprep.subr.mxu0 0.0
    %402 = vmatpush1.msra.mxu0 0.0
    %403 = vmatprep.subr.mxu0 0.0
    %404 = vmatpush1.msra.mxu0 0.0
    %405 = vmatprep.subr.mxu0 0.0
    %406 = vmatpush1.msra.mxu0 0.0
    %407 = vmatprep.subr.mxu0 0.0
    %408 = vmatpush1.msra.mxu0 0.0
    %409 = vmatprep.subr.mxu0 0.0
    %410 = vmatpush1.msra.mxu0 0.0
    %411 = vmatprep.subr.mxu0 0.0
    %412 = vmatpush1.msra.mxu0 0.0
    %413 = vmatprep.subr.mxu0 0.0
    %414 = vmatpush1.msra.mxu0 0.0
    %415 = vmatprep.subr.mxu0 0.0
    %416 = vmatpush1.msra.mxu0 0.0
    %417 = vmatprep.subr.mxu0 0.0
    %418 = vmatpush1.msra.mxu0 0.0
    %419 = vmatprep.subr.mxu0 0.0
    %420 = vmatpush1.msra.mxu0 0.0
    %421 = vmatprep.subr.mxu0 0.0
    %422 = vmatpush1.msra.mxu0 0.0
    %423 = vmatprep.subr.mxu0 0.0
    %424 = vmatpush1.msra.mxu0 0.0
    %425 = vmatprep.subr.mxu0 0.0
    %426 = vmatpush1.msra.mxu0 0.0
    %427 = vmatprep.subr.mxu0 0.0
    %428 = vmatpush1.msra.mxu0 0.0
    %429 = vmatprep.subr.mxu0 0.0
    %430 = vmatpush1.msra.mxu0 0.0
    %431 = vmatprep.subr.mxu0 0.0
    %432 = vmatpush1.msra.mxu0 0.0
    %433 = vmatprep.subr.mxu0 0.0
    %434 = vmatpush1.msra.mxu0 0.0
    %435 = vmatprep.subr.mxu0 0.0
    %436 = vmatpush1.msra.mxu0 0.0
    %437 = vmatprep.subr.mxu0 0.0
    %438 = vmatpush1.msra.mxu0 0.0
    %439 = vmatprep.subr.mxu0 0.0
    %440 = vmatpush1.msra.mxu0 0.0
    %441 = vmatprep.subr.mxu0 0.0
    %442 = vmatpush1.msra.mxu0 0.0
    %443 = vmatprep.subr.mxu0 0.0
    %444 = vmatpush1.msra.mxu0 0.0
    %445 = vmatprep.subr.mxu0 0.0
    %446 = vmatpush1.msra.mxu0 0.0
    %447 = vmatprep.subr.mxu0 0.0
    %448 = vmatpush1.msra.mxu0 0.0
    %449 = vmatprep.subr.mxu0 0.0
    %450 = vmatpush1.msra.mxu0 0.0
    %451 = vmatprep.subr.mxu0 0.0
    %452 = vmatpush1.msra.mxu0 0.0
    %453 = vmatprep.subr.mxu0 0.0
    %454 = vmatpush1.msra.mxu0 0.0
    %455 = vmatprep.subr.mxu0 0.0
    %456 = vmatpush1.msra.mxu0 0.0
    %457 = vmatprep.mubr.f32.mxu0 0.0
    %458 = vmatmul.mubr.f32.gmra.mrb[0].mxu0 %v382
    %v459 = vpop.f32.mrb[0].mxu0
    %v460 = vadd.f32 %v379, %v459
    %v461 = vpop.f32.mrb[0].mxu0
    %462 = vmatprep.mubr.f32.mxu0 0.0
    %463 = vmatmul.mubr.f32.gmra.mrb[0].mxu0 %v385
    %v464 = vpop.f32.mrb[0].mxu0
    %v465 = vadd.f32 %v379, %v464
    %v466 = vpop.f32.mrb[0].mxu0
    %467 = vmatprep.mubr.f32.mxu0 0.0
    %468 = vmatmul.mubr.f32.gmra.mrb[0].mxu0 %v388
    %v469 = vpop.f32.mrb[0].mxu0
    %v470 = vadd.f32 %v379, %v469
    %v471 = vpop.f32.mrb[0].mxu0
    %472 = vmatprep.mubr.f32.mxu0 0.0
    %473 = vmatmul.mubr.f32.gmra.mrb[0].mxu0 %v391
    %v474 = vpop.f32.mrb[0].mxu0
    %v475 = vadd.f32 %v379, %v474
    %v476 = vpop.f32.mrb[0].mxu0
    %477 = vdwg.mxu0
    %vm478 = vcmp.gt.f32.partialorder %v232, 0.0
    %vm479 = vcmp.gt.f32.partialorder %v237, 0.0
    %vm480 = vcmp.gt.f32.partialorder %v242, 0.0
    %vm481 = vcmp.gt.f32.partialorder %v247, 0.0
    %v482 = vadd.f32 %v232, 1.0
    %v483 = vadd.f32 %v237, 1.0
    %v484 = vadd.f32 %v242, 1.0
    %v485 = vadd.f32 %v247, 1.0
    %v486 = vmul.f32 %v232, 1.442695
    %v487 = vpow.pop %v486
    %v488 = vmul.f32 %v237, 1.442695
    %v489 = vpow.pop %v488
    %v490 = vmul.f32 %v242, 1.442695
    %v491 = vpow.pop %v490
    %v492 = vmul.f32 %v247, 1.442695
    %v493 = vpow.pop %v492
    %v494 = vsel %vm478, %v482, %v487
    %v495 = vsel %vm479, %v483, %v489
    %v496 = vsel %vm480, %v484, %v491
    %v497 = vsel %vm481, %v485, %v493
    %vm498 = vcmp.gt.f32.partialorder %v346, 0.0
    %vm499 = vcmp.gt.f32.partialorder %v351, 0.0
    %vm500 = vcmp.gt.f32.partialorder %v356, 0.0
    %vm501 = vcmp.gt.f32.partialorder %v361, 0.0
    %v502 = vadd.f32 %v346, 1.0
    %v503 = vadd.f32 %v351, 1.0
    %v504 = vadd.f32 %v356, 1.0
    %v505 = vadd.f32 %v361, 1.0
    %v506 = vmul.f32 %v346, 1.442695
    %v507 = vpow.pop %v506
    %v508 = vmul.f32 %v351, 1.442695
    %v509 = vpow.pop %v508
    %v510 = vmul.f32 %v356, 1.442695
    %v511 = vpow.pop %v510
    %v512 = vmul.f32 %v361, 1.442695
    %v513 = vpow.pop %v512
    %v514 = vsel %vm498, %v502, %v507
    %v515 = vsel %vm499, %v503, %v509
    %v516 = vsel %vm500, %v504, %v511
    %v517 = vsel %vm501, %v505, %v513
    %518 = vxpose.xlu0.b32.start [1/16] %v514, 128
    %519 = vxpose.xlu0.b32.cont [2/16] %v515, 128
    %520 = vxpose.xlu0.b32.cont [3/16] 0.0, 128
    %521 = vxpose.xlu0.b32.cont [4/16] 0.0, 128
    %522 = vxpose.xlu0.b32.cont [5/16] 0.0, 128
    %523 = vxpose.xlu0.b32.cont [6/16] 0.0, 128
    %524 = vxpose.xlu0.b32.cont [7/16] 0.0, 128
    %525 = vxpose.xlu0.b32.cont [8/16] 0.0, 128
    %526 = vxpose.xlu0.b32.cont [9/16] 0.0, 128
    %527 = vxpose.xlu0.b32.cont [10/16] 0.0, 128
    %528 = vxpose.xlu0.b32.cont [11/16] 0.0, 128
    %529 = vxpose.xlu0.b32.cont [12/16] 0.0, 128
    %530 = vxpose.xlu0.b32.cont [13/16] 0.0, 128
    %531 = vxpose.xlu0.b32.cont [14/16] 0.0, 128
    %532 = vxpose.xlu0.b32.cont [15/16] 0.0, 128
    %533 = vxpose.xlu0.b32.end [16/16] 0.0, 128
    %v534 = vpop.trf.xlu0
    %v535 = vpop.trf.xlu0
    %v536 = vpop.trf.xlu0
    %v537 = vpop.trf.xlu0
    %v538 = vpop.trf.xlu0
    %v539 = vpop.trf.xlu0
    %v540 = vpop.trf.xlu0
    %v541 = vpop.trf.xlu0
    %v542 = vpop.trf.xlu0
    %v543 = vpop.trf.xlu0
    %v544 = vpop.trf.xlu0
    %v545 = vpop.trf.xlu0
    %v546 = vpop.trf.xlu0
    %v547 = vpop.trf.xlu0
    %v548 = vpop.trf.xlu0
    %v549 = vpop.trf.xlu0
    %550 = vxpose.xlu0.b32.start [1/16] %v516, 128
    %551 = vxpose.xlu0.b32.cont [2/16] %v517, 128
    %552 = vxpose.xlu0.b32.cont [3/16] 0.0, 128
    %553 = vxpose.xlu0.b32.cont [4/16] 0.0, 128
    %554 = vxpose.xlu0.b32.cont [5/16] 0.0, 128
    %555 = vxpose.xlu0.b32.cont [6/16] 0.0, 128
    %556 = vxpose.xlu0.b32.cont [7/16] 0.0, 128
    %557 = vxpose.xlu0.b32.cont [8/16] 0.0, 128
    %558 = vxpose.xlu0.b32.cont [9/16] 0.0, 128
    %559 = vxpose.xlu0.b32.cont [10/16] 0.0, 128
    %560 = vxpose.xlu0.b32.cont [11/16] 0.0, 128
    %561 = vxpose.xlu0.b32.cont [12/16] 0.0, 128
    %562 = vxpose.xlu0.b32.cont [13/16] 0.0, 128
    %563 = vxpose.xlu0.b32.cont [14/16] 0.0, 128
    %564 = vxpose.xlu0.b32.cont [15/16] 0.0, 128
    %565 = vxpose.xlu0.b32.end [16/16] 0.0, 128
    %v566 = vpop.trf.xlu0
    %v567 = vpop.trf.xlu0
    %v568 = vpop.trf.xlu0
    %v569 = vpop.trf.xlu0
    %v570 = vpop.trf.xlu0
    %v571 = vpop.trf.xlu0
    %v572 = vpop.trf.xlu0
    %v573 = vpop.trf.xlu0
    %v574 = vpop.trf.xlu0
    %v575 = vpop.trf.xlu0
    %v576 = vpop.trf.xlu0
    %v577 = vpop.trf.xlu0
    %v578 = vpop.trf.xlu0
    %v579 = vpop.trf.xlu0
    %v580 = vpop.trf.xlu0
    %v581 = vpop.trf.xlu0
    %vm582 = vcmask 130048
    %v584 = vsel %vm582, %v534, 0
    %v587 = vsel %vm582, %v535, 0
    %v590 = vsel %vm582, %v536, 0
    %v593 = vsel %vm582, %v537, 0
    %595 = vmatprep.subr.mxu0 0.0
    %596 = vmatpush1.msra.mxu0 %v460
    %597 = vmatprep.subr.mxu0 0.0
    %598 = vmatpush1.msra.mxu0 %v465
    %599 = vmatprep.subr.mxu0 0.0
    %600 = vmatpush1.msra.mxu0 0.0
    %601 = vmatprep.subr.mxu0 0.0
    %602 = vmatpush1.msra.mxu0 0.0
    %603 = vmatprep.subr.mxu0 0.0
    %604 = vmatpush1.msra.mxu0 0.0
    %605 = vmatprep.subr.mxu0 0.0
    %606 = vmatpush1.msra.mxu0 0.0
    %607 = vmatprep.subr.mxu0 0.0
    %608 = vmatpush1.msra.mxu0 0.0
    %609 = vmatprep.subr.mxu0 0.0
    %610 = vmatpush1.msra.mxu0 0.0
    %611 = vmatprep.subr.mxu0 0.0
    %612 = vmatpush1.msra.mxu0 0.0
    %613 = vmatprep.subr.mxu0 0.0
    %614 = vmatpush1.msra.mxu0 0.0
    %615 = vmatprep.subr.mxu0 0.0
    %616 = vmatpush1.msra.mxu0 0.0
    %617 = vmatprep.subr.mxu0 0.0
    %618 = vmatpush1.msra.mxu0 0.0
    %619 = vmatprep.subr.mxu0 0.0
    %620 = vmatpush1.msra.mxu0 0.0
    %621 = vmatprep.subr.mxu0 0.0
    %622 = vmatpush1.msra.mxu0 0.0
    %623 = vmatprep.subr.mxu0 0.0
    %624 = vmatpush1.msra.mxu0 0.0
    %625 = vmatprep.subr.mxu0 0.0
    %626 = vmatpush1.msra.mxu0 0.0
    %627 = vmatprep.subr.mxu0 0.0
    %628 = vmatpush1.msra.mxu0 0.0
    %629 = vmatprep.subr.mxu0 0.0
    %630 = vmatpush1.msra.mxu0 0.0
    %631 = vmatprep.subr.mxu0 0.0
    %632 = vmatpush1.msra.mxu0 0.0
    %633 = vmatprep.subr.mxu0 0.0
    %634 = vmatpush1.msra.mxu0 0.0
    %635 = vmatprep.subr.mxu0 0.0
    %636 = vmatpush1.msra.mxu0 0.0
    %637 = vmatprep.subr.mxu0 0.0
    %638 = vmatpush1.msra.mxu0 0.0
    %639 = vmatprep.subr.mxu0 0.0
    %640 = vmatpush1.msra.mxu0 0.0
    %641 = vmatprep.subr.mxu0 0.0
    %642 = vmatpush1.msra.mxu0 0.0
    %643 = vmatprep.subr.mxu0 0.0
    %644 = vmatpush1.msra.mxu0 0.0
    %645 = vmatprep.subr.mxu0 0.0
    %646 = vmatpush1.msra.mxu0 0.0
    %647 = vmatprep.subr.mxu0 0.0
    %648 = vmatpush1.msra.mxu0 0.0
    %649 = vmatprep.subr.mxu0 0.0
    %650 = vmatpush1.msra.mxu0 0.0
    %651 = vmatprep.subr.mxu0 0.0
    %652 = vmatpush1.msra.mxu0 0.0
    %653 = vmatprep.subr.mxu0 0.0
    %654 = vmatpush1.msra.mxu0 0.0
    %655 = vmatprep.subr.mxu0 0.0
    %656 = vmatpush1.msra.mxu0 0.0
    %657 = vmatprep.subr.mxu0 0.0
    %658 = vmatpush1.msra.mxu0 0.0
    %659 = vmatprep.mubr.f32.mxu0 0.0
    %660 = vmatmul.mubr.f32.gmra.mrb[0].mxu0 %v584
    %v661 = vpop.f32.mrb[0].mxu0
    %v662 = vadd.f32 0.0, %v661
    %v663 = vpop.f32.mrb[0].mxu0
    %664 = vmatprep.mubr.f32.mxu0 0.0
    %665 = vmatmul.mubr.f32.gmra.mrb[0].mxu0 %v587
    %v666 = vpop.f32.mrb[0].mxu0
    %v667 = vadd.f32 0.0, %v666
    %v668 = vpop.f32.mrb[0].mxu0
    %669 = vmatprep.mubr.f32.mxu0 0.0
    %670 = vmatmul.mubr.f32.gmra.mrb[0].mxu0 %v590
    %v671 = vpop.f32.mrb[0].mxu0
    %v672 = vadd.f32 0.0, %v671
    %v673 = vpop.f32.mrb[0].mxu0
    %674 = vmatprep.mubr.f32.mxu0 0.0
    %675 = vmatmul.mubr.f32.gmra.mrb[0].mxu0 %v593
    %v676 = vpop.f32.mrb[0].mxu0
    %v677 = vadd.f32 0.0, %v676
    %v678 = vpop.f32.mrb[0].mxu0
    %679 = vdwg.mxu0
    %v681 = vsel %vm582, %v566, 0
    %v684 = vsel %vm582, %v567, 0
    %v687 = vsel %vm582, %v568, 0
    %v690 = vsel %vm582, %v569, 0
    %692 = vmatprep.subr.mxu0 0.0
    %693 = vmatpush1.msra.mxu0 %v470
    %694 = vmatprep.subr.mxu0 0.0
    %695 = vmatpush1.msra.mxu0 %v475
    %696 = vmatprep.subr.mxu0 0.0
    %697 = vmatpush1.msra.mxu0 0.0
    %698 = vmatprep.subr.mxu0 0.0
    %699 = vmatpush1.msra.mxu0 0.0
    %700 = vmatprep.subr.mxu0 0.0
    %701 = vmatpush1.msra.mxu0 0.0
    %702 = vmatprep.subr.mxu0 0.0
    %703 = vmatpush1.msra.mxu0 0.0
    %704 = vmatprep.subr.mxu0 0.0
    %705 = vmatpush1.msra.mxu0 0.0
    %706 = vmatprep.subr.mxu0 0.0
    %707 = vmatpush1.msra.mxu0 0.0
    %708 = vmatprep.subr.mxu0 0.0
    %709 = vmatpush1.msra.mxu0 0.0
    %710 = vmatprep.subr.mxu0 0.0
    %711 = vmatpush1.msra.mxu0 0.0
    %712 = vmatprep.subr.mxu0 0.0
    %713 = vmatpush1.msra.mxu0 0.0
    %714 = vmatprep.subr.mxu0 0.0
    %715 = vmatpush1.msra.mxu0 0.0
    %716 = vmatprep.subr.mxu0 0.0
    %717 = vmatpush1.msra.mxu0 0.0
    %718 = vmatprep.subr.mxu0 0.0
    %719 = vmatpush1.msra.mxu0 0.0
    %720 = vmatprep.subr.mxu0 0.0
    %721 = vmatpush1.msra.mxu0 0.0
    %722 = vmatprep.subr.mxu0 0.0
    %723 = vmatpush1.msra.mxu0 0.0
    %724 = vmatprep.subr.mxu0 0.0
    %725 = vmatpush1.msra.mxu0 0.0
    %726 = vmatprep.subr.mxu0 0.0
    %727 = vmatpush1.msra.mxu0 0.0
    %728 = vmatprep.subr.mxu0 0.0
    %729 = vmatpush1.msra.mxu0 0.0
    %730 = vmatprep.subr.mxu0 0.0
    %731 = vmatpush1.msra.mxu0 0.0
    %732 = vmatprep.subr.mxu0 0.0
    %733 = vmatpush1.msra.mxu0 0.0
    %734 = vmatprep.subr.mxu0 0.0
    %735 = vmatpush1.msra.mxu0 0.0
    %736 = vmatprep.subr.mxu0 0.0
    %737 = vmatpush1.msra.mxu0 0.0
    %738 = vmatprep.subr.mxu0 0.0
    %739 = vmatpush1.msra.mxu0 0.0
    %740 = vmatprep.subr.mxu0 0.0
    %741 = vmatpush1.msra.mxu0 0.0
    %742 = vmatprep.subr.mxu0 0.0
    %743 = vmatpush1.msra.mxu0 0.0
    %744 = vmatprep.subr.mxu0 0.0
    %745 = vmatpush1.msra.mxu0 0.0
    %746 = vmatprep.subr.mxu0 0.0
    %747 = vmatpush1.msra.mxu0 0.0
    %748 = vmatprep.subr.mxu0 0.0
    %749 = vmatpush1.msra.mxu0 0.0
    %750 = vmatprep.subr.mxu0 0.0
    %751 = vmatpush1.msra.mxu0 0.0
    %752 = vmatprep.subr.mxu0 0.0
    %753 = vmatpush1.msra.mxu0 0.0
    %754 = vmatprep.subr.mxu0 0.0
    %755 = vmatpush1.msra.mxu0 0.0
    %756 = vmatprep.mubr.f32.mxu0 0.0
    %757 = vmatmul.mubr.f32.gmra.mrb[0].mxu0 %v681
    %v758 = vpop.f32.mrb[0].mxu0
    %v759 = vadd.f32 0.0, %v758
    %v760 = vpop.f32.mrb[0].mxu0
    %761 = vmatprep.mubr.f32.mxu0 0.0
    %762 = vmatmul.mubr.f32.gmra.mrb[0].mxu0 %v684
    %v763 = vpop.f32.mrb[0].mxu0
    %v764 = vadd.f32 0.0, %v763
    %v765 = vpop.f32.mrb[0].mxu0
    %766 = vmatprep.mubr.f32.mxu0 0.0
    %767 = vmatmul.mubr.f32.gmra.mrb[0].mxu0 %v687
    %v768 = vpop.f32.mrb[0].mxu0
    %v769 = vadd.f32 0.0, %v768
    %v770 = vpop.f32.mrb[0].mxu0
    %771 = vmatprep.mubr.f32.mxu0 0.0
    %772 = vmatmul.mubr.f32.gmra.mrb[0].mxu0 %v690
    %v773 = vpop.f32.mrb[0].mxu0
    %v774 = vadd.f32 0.0, %v773
    %v775 = vpop.f32.mrb[0].mxu0
    %776 = vdwg.mxu0
    %v777 = vsel %vm152, %v514, 0.0
    %v778 = vsel %vm152, %v515, 0.0
    %v779 = vadd.f32 %v777, %v778
    %v780 = vrot.slane %v779, 4
    %v781 = vadd.f32 %v779, %v780
    %v782 = vrot.slane %v781, 2
    %v783 = vadd.f32 %v781, %v782
    %v784 = vrot.slane %v783, 1
    %v785 = vadd.f32 %v783, %v784
    %v786 = vsel %vm152, %v516, 0.0
    %v787 = vsel %vm152, %v517, 0.0
    %v788 = vadd.f32 %v786, %v787
    %v789 = vrot.slane %v788, 4
    %v790 = vadd.f32 %v788, %v789
    %v791 = vrot.slane %v790, 2
    %v792 = vadd.f32 %v790, %v791
    %v793 = vrot.slane %v792, 1
    %v794 = vadd.f32 %v792, %v793
    %v795 = vmul.f32 %v494, %v785
    %v796 = vmul.f32 %v495, %v785
    %v797 = vmul.f32 %v496, %v794
    %v798 = vmul.f32 %v497, %v794
    %v799 = vld [vmem:[#allocation11] sm:$0xff]
    %v800 = vld [vmem:[#allocation11 + $0x8] sm:$0xff]
    %v801 = vld [vmem:[#allocation11 + $0x10] sm:$0xff]
    %v802 = vld [vmem:[#allocation11 + $0x18] sm:$0xff]
    %v803 = vmul.f32 %v662, %v799
    %v804 = vmul.f32 %v667, %v800
    %v805 = vmul.f32 %v672, %v801
    %v806 = vmul.f32 %v677, %v802
    %v807 = vmul.f32 %v759, %v799
    %v808 = vmul.f32 %v764, %v800
    %v809 = vmul.f32 %v769, %v801
    %v810 = vmul.f32 %v774, %v802
    %v812 = vsel %vm152, %v494, 0
    %v815 = vsel %vm152, %v495, 0
    %817 = vmatprep.subr.mxu0 0.0
    %818 = vmatpush1.msra.mxu0 %v803
    %819 = vmatprep.subr.mxu0 0.0
    %820 = vmatpush1.msra.mxu0 %v804
    %821 = vmatprep.subr.mxu0 0.0
    %822 = vmatpush1.msra.mxu0 %v805
    %823 = vmatprep.subr.mxu0 0.0
    %824 = vmatpush1.msra.mxu0 %v806
    %825 = vmatprep.subr.mxu0 0.0
    %826 = vmatpush1.msra.mxu0 0.0
    %827 = vmatprep.subr.mxu0 0.0
    %828 = vmatpush1.msra.mxu0 0.0
    %829 = vmatprep.subr.mxu0 0.0
    %830 = vmatpush1.msra.mxu0 0.0
    %831 = vmatprep.subr.mxu0 0.0
    %832 = vmatpush1.msra.mxu0 0.0
    %833 = vmatprep.subr.mxu0 0.0
    %834 = vmatpush1.msra.mxu0 0.0
    %835 = vmatprep.subr.mxu0 0.0
    %836 = vmatpush1.msra.mxu0 0.0
    %837 = vmatprep.subr.mxu0 0.0
    %838 = vmatpush1.msra.mxu0 0.0
    %839 = vmatprep.subr.mxu0 0.0
    %840 = vmatpush1.msra.mxu0 0.0
    %841 = vmatprep.subr.mxu0 0.0
    %842 = vmatpush1.msra.mxu0 0.0
    %843 = vmatprep.subr.mxu0 0.0
    %844 = vmatpush1.msra.mxu0 0.0
    %845 = vmatprep.subr.mxu0 0.0
    %846 = vmatpush1.msra.mxu0 0.0
    %847 = vmatprep.subr.mxu0 0.0
    %848 = vmatpush1.msra.mxu0 0.0
    %849 = vmatprep.subr.mxu0 0.0
    %850 = vmatpush1.msra.mxu0 0.0
    %851 = vmatprep.subr.mxu0 0.0
    %852 = vmatpush1.msra.mxu0 0.0
    %853 = vmatprep.subr.mxu0 0.0
    %854 = vmatpush1.msra.mxu0 0.0
    %855 = vmatprep.subr.mxu0 0.0
    %856 = vmatpush1.msra.mxu0 0.0
    %857 = vmatprep.subr.mxu0 0.0
    %858 = vmatpush1.msra.mxu0 0.0
    %859 = vmatprep.subr.mxu0 0.0
    %860 = vmatpush1.msra.mxu0 0.0
    %861 = vmatprep.subr.mxu0 0.0
    %862 = vmatpush1.msra.mxu0 0.0
    %863 = vmatprep.subr.mxu0 0.0
    %864 = vmatpush1.msra.mxu0 0.0
    %865 = vmatprep.subr.mxu0 0.0
    %866 = vmatpush1.msra.mxu0 0.0
    %867 = vmatprep.subr.mxu0 0.0
    %868 = vmatpush1.msra.mxu0 0.0
    %869 = vmatprep.subr.mxu0 0.0
    %870 = vmatpush1.msra.mxu0 0.0
    %871 = vmatprep.subr.mxu0 0.0
    %872 = vmatpush1.msra.mxu0 0.0
    %873 = vmatprep.subr.mxu0 0.0
    %874 = vmatpush1.msra.mxu0 0.0
    %875 = vmatprep.subr.mxu0 0.0
    %876 = vmatpush1.msra.mxu0 0.0
    %877 = vmatprep.subr.mxu0 0.0
    %878 = vmatpush1.msra.mxu0 0.0
    %879 = vmatprep.subr.mxu0 0.0
    %880 = vmatpush1.msra.mxu0 0.0
    %881 = vmatprep.mubr.f32.mxu0 0.0
    %882 = vmatmul.mubr.f32.gmra.mrb[0].mxu0 %v812
    %v883 = vpop.f32.mrb[0].mxu0
    %v884 = vadd.f32 0.0, %v883
    %v885 = vpop.f32.mrb[0].mxu0
    %886 = vmatprep.mubr.f32.mxu0 0.0
    %887 = vmatmul.mubr.f32.gmra.mrb[0].mxu0 %v815
    %v888 = vpop.f32.mrb[0].mxu0
    %v889 = vadd.f32 0.0, %v888
    %v890 = vpop.f32.mrb[0].mxu0
    %891 = vdwg.mxu0
    %v893 = vsel %vm152, %v496, 0
    %v896 = vsel %vm152, %v497, 0
    %898 = vmatprep.subr.mxu0 0.0
    %899 = vmatpush1.msra.mxu0 %v807
    %900 = vmatprep.subr.mxu0 0.0
    %901 = vmatpush1.msra.mxu0 %v808
    %902 = vmatprep.subr.mxu0 0.0
    %903 = vmatpush1.msra.mxu0 %v809
    %904 = vmatprep.subr.mxu0 0.0
    %905 = vmatpush1.msra.mxu0 %v810
    %906 = vmatprep.subr.mxu0 0.0
    %907 = vmatpush1.msra.mxu0 0.0
    %908 = vmatprep.subr.mxu0 0.0
    %909 = vmatpush1.msra.mxu0 0.0
    %910 = vmatprep.subr.mxu0 0.0
    %911 = vmatpush1.msra.mxu0 0.0
    %912 = vmatprep.subr.mxu0 0.0
    %913 = vmatpush1.msra.mxu0 0.0
    %914 = vmatprep.subr.mxu0 0.0
    %915 = vmatpush1.msra.mxu0 0.0
    %916 = vmatprep.subr.mxu0 0.0
    %917 = vmatpush1.msra.mxu0 0.0
    %918 = vmatprep.subr.mxu0 0.0
    %919 = vmatpush1.msra.mxu0 0.0
    %920 = vmatprep.subr.mxu0 0.0
    %921 = vmatpush1.msra.mxu0 0.0
    %922 = vmatprep.subr.mxu0 0.0
    %923 = vmatpush1.msra.mxu0 0.0
    %924 = vmatprep.subr.mxu0 0.0
    %925 = vmatpush1.msra.mxu0 0.0
    %926 = vmatprep.subr.mxu0 0.0
    %927 = vmatpush1.msra.mxu0 0.0
    %928 = vmatprep.subr.mxu0 0.0
    %929 = vmatpush1.msra.mxu0 0.0
    %930 = vmatprep.subr.mxu0 0.0
    %931 = vmatpush1.msra.mxu0 0.0
    %932 = vmatprep.subr.mxu0 0.0
    %933 = vmatpush1.msra.mxu0 0.0
    %934 = vmatprep.subr.mxu0 0.0
    %935 = vmatpush1.msra.mxu0 0.0
    %936 = vmatprep.subr.mxu0 0.0
    %937 = vmatpush1.msra.mxu0 0.0
    %938 = vmatprep.subr.mxu0 0.0
    %939 = vmatpush1.msra.mxu0 0.0
    %940 = vmatprep.subr.mxu0 0.0
    %941 = vmatpush1.msra.mxu0 0.0
    %942 = vmatprep.subr.mxu0 0.0
    %943 = vmatpush1.msra.mxu0 0.0
    %944 = vmatprep.subr.mxu0 0.0
    %945 = vmatpush1.msra.mxu0 0.0
    %946 = vmatprep.subr.mxu0 0.0
    %947 = vmatpush1.msra.mxu0 0.0
    %948 = vmatprep.subr.mxu0 0.0
    %949 = vmatpush1.msra.mxu0 0.0
    %950 = vmatprep.subr.mxu0 0.0
    %951 = vmatpush1.msra.mxu0 0.0
    %952 = vmatprep.subr.mxu0 0.0
    %953 = vmatpush1.msra.mxu0 0.0
    %954 = vmatprep.subr.mxu0 0.0
    %955 = vmatpush1.msra.mxu0 0.0
    %956 = vmatprep.subr.mxu0 0.0
    %957 = vmatpush1.msra.mxu0 0.0
    %958 = vmatprep.subr.mxu0 0.0
    %959 = vmatpush1.msra.mxu0 0.0
    %960 = vmatprep.subr.mxu0 0.0
    %961 = vmatpush1.msra.mxu0 0.0
    %962 = vmatprep.mubr.f32.mxu0 0.0
    %963 = vmatmul.mubr.f32.gmra.mrb[0].mxu0 %v893
    %v964 = vpop.f32.mrb[0].mxu0
    %v965 = vadd.f32 0.0, %v964
    %v966 = vpop.f32.mrb[0].mxu0
    %967 = vmatprep.mubr.f32.mxu0 0.0
    %968 = vmatmul.mubr.f32.gmra.mrb[0].mxu0 %v896
    %v969 = vpop.f32.mrb[0].mxu0
    %v970 = vadd.f32 0.0, %v969
    %v971 = vpop.f32.mrb[0].mxu0
    %972 = vdwg.mxu0
    %v974 = vsel %vm152, %v795, 0
    %v977 = vsel %vm152, %v796, 0
    %v980 = vsel %vm152, %v797, 0
    %v983 = vsel %vm152, %v798, 0
    %985 = vmatprep.subr.mxu0 0.0
    %986 = vmatpush1.msra.mxu0 %v799
    %987 = vmatprep.subr.mxu0 0.0
    %988 = vmatpush1.msra.mxu0 %v800
    %989 = vmatprep.subr.mxu0 0.0
    %990 = vmatpush1.msra.mxu0 %v801
    %991 = vmatprep.subr.mxu0 0.0
    %992 = vmatpush1.msra.mxu0 %v802
    %993 = vmatprep.subr.mxu0 0.0
    %994 = vmatpush1.msra.mxu0 0.0
    %995 = vmatprep.subr.mxu0 0.0
    %996 = vmatpush1.msra.mxu0 0.0
    %997 = vmatprep.subr.mxu0 0.0
    %998 = vmatpush1.msra.mxu0 0.0
    %999 = vmatprep.subr.mxu0 0.0
    %1000 = vmatpush1.msra.mxu0 0.0
    %1001 = vmatprep.subr.mxu0 0.0
    %1002 = vmatpush1.msra.mxu0 0.0
    %1003 = vmatprep.subr.mxu0 0.0
    %1004 = vmatpush1.msra.mxu0 0.0
    %1005 = vmatprep.subr.mxu0 0.0
    %1006 = vmatpush1.msra.mxu0 0.0
    %1007 = vmatprep.subr.mxu0 0.0
    %1008 = vmatpush1.msra.mxu0 0.0
    %1009 = vmatprep.subr.mxu0 0.0
    %1010 = vmatpush1.msra.mxu0 0.0
    %1011 = vmatprep.subr.mxu0 0.0
    %1012 = vmatpush1.msra.mxu0 0.0
    %1013 = vmatprep.subr.mxu0 0.0
    %1014 = vmatpush1.msra.mxu0 0.0
    %1015 = vmatprep.subr.mxu0 0.0
    %1016 = vmatpush1.msra.mxu0 0.0
    %1017 = vmatprep.subr.mxu0 0.0
    %1018 = vmatpush1.msra.mxu0 0.0
    %1019 = vmatprep.subr.mxu0 0.0
    %1020 = vmatpush1.msra.mxu0 0.0
    %1021 = vmatprep.subr.mxu0 0.0
    %1022 = vmatpush1.msra.mxu0 0.0
    %1023 = vmatprep.subr.mxu0 0.0
    %1024 = vmatpush1.msra.mxu0 0.0
    %1025 = vmatprep.subr.mxu0 0.0
    %1026 = vmatpush1.msra.mxu0 0.0
    %1027 = vmatprep.subr.mxu0 0.0
    %1028 = vmatpush1.msra.mxu0 0.0
    %1029 = vmatprep.subr.mxu0 0.0
    %1030 = vmatpush1.msra.mxu0 0.0
    %1031 = vmatprep.subr.mxu0 0.0
    %1032 = vmatpush1.msra.mxu0 0.0
    %1033 = vmatprep.subr.mxu0 0.0
    %1034 = vmatpush1.msra.mxu0 0.0
    %1035 = vmatprep.subr.mxu0 0.0
    %1036 = vmatpush1.msra.mxu0 0.0
    %1037 = vmatprep.subr.mxu0 0.0
    %1038 = vmatpush1.msra.mxu0 0.0
    %1039 = vmatprep.subr.mxu0 0.0
    %1040 = vmatpush1.msra.mxu0 0.0
    %1041 = vmatprep.subr.mxu0 0.0
    %1042 = vmatpush1.msra.mxu0 0.0
    %1043 = vmatprep.subr.mxu0 0.0
    %1044 = vmatpush1.msra.mxu0 0.0
    %1045 = vmatprep.subr.mxu0 0.0
    %1046 = vmatpush1.msra.mxu0 0.0
    %1047 = vmatprep.subr.mxu0 0.0
    %1048 = vmatpush1.msra.mxu0 0.0
    %1049 = vmatprep.mubr.f32.mxu0 0.0
    %1050 = vmatmul.mubr.f32.gmra.mrb[0].mxu0 %v974
    %v1051 = vpop.f32.mrb[0].mxu0
    %v1052 = vadd.f32 1e-06, %v1051
    %v1053 = vpop.f32.mrb[0].mxu0
    %1054 = vmatprep.mubr.f32.mxu0 0.0
    %1055 = vmatmul.mubr.f32.gmra.mrb[0].mxu0 %v977
    %v1056 = vpop.f32.mrb[0].mxu0
    %v1057 = vadd.f32 1e-06, %v1056
    %v1058 = vpop.f32.mrb[0].mxu0
    %1059 = vmatprep.mubr.f32.mxu0 0.0
    %1060 = vmatmul.mubr.f32.gmra.mrb[0].mxu0 %v980
    %v1061 = vpop.f32.mrb[0].mxu0
    %v1062 = vadd.f32 1e-06, %v1061
    %v1063 = vpop.f32.mrb[0].mxu0
    %1064 = vmatprep.mubr.f32.mxu0 0.0
    %1065 = vmatmul.mubr.f32.gmra.mrb[0].mxu0 %v983
    %v1066 = vpop.f32.mrb[0].mxu0
    %v1067 = vadd.f32 1e-06, %v1066
    %v1068 = vpop.f32.mrb[0].mxu0
    %1069 = vdwg.mxu0
    %v1070 = vrcp.pop %v1052
    %v1071 = vrcp.pop %v1057
    %v1072 = vrcp.pop %v1062
    %v1073 = vrcp.pop %v1067
    %v1074 = vmul.f32 %v884, %v1070
    %v1075 = vmul.f32 %v889, %v1071
    %v1076 = vmul.f32 %v965, %v1072
    %v1077 = vmul.f32 %v970, %v1073
    %v1078 = vld [vmem:[#allocation13] sm:$0xff]
    %v1079 = vld [vmem:[#allocation13 + $0x8] sm:$0xff]
    %v1080 = vld [vmem:[#allocation13 + $0x10] sm:$0xff]
    %v1081 = vld [vmem:[#allocation13 + $0x18] sm:$0xff]
    %v1082 = vld [vmem:[#allocation14] sm:$0x1]
    %v1084 = vlaneseq
    %v1085 = vshrl.u32 %v1084, 7
    %v1086 = vsub.s32 0, %v1085
    %v1087 = vrot.slane %v1082, %v1086
    %v1090 = vsel %vm152, %v1074, 0
    %v1093 = vsel %vm152, %v1075, 0
    %v1096 = vsel %vm152, %v1076, 0
    %v1099 = vsel %vm152, %v1077, 0
    %1101 = vmatprep.subr.mxu0 0.0
    %1102 = vmatpush1.msra.mxu0 %v1078
    %1103 = vmatprep.subr.mxu0 0.0
    %1104 = vmatpush1.msra.mxu0 %v1079
    %1105 = vmatprep.subr.mxu0 0.0
    %1106 = vmatpush1.msra.mxu0 %v1080
    %1107 = vmatprep.subr.mxu0 0.0
    %1108 = vmatpush1.msra.mxu0 %v1081
    %1109 = vmatprep.subr.mxu0 0.0
    %1110 = vmatpush1.msra.mxu0 0.0
    %1111 = vmatprep.subr.mxu0 0.0
    %1112 = vmatpush1.msra.mxu0 0.0
    %1113 = vmatprep.subr.mxu0 0.0
    %1114 = vmatpush1.msra.mxu0 0.0
    %1115 = vmatprep.subr.mxu0 0.0
    %1116 = vmatpush1.msra.mxu0 0.0
    %1117 = vmatprep.subr.mxu0 0.0
    %1118 = vmatpush1.msra.mxu0 0.0
    %1119 = vmatprep.subr.mxu0 0.0
    %1120 = vmatpush1.msra.mxu0 0.0
    %1121 = vmatprep.subr.mxu0 0.0
    %1122 = vmatpush1.msra.mxu0 0.0
    %1123 = vmatprep.subr.mxu0 0.0
    %1124 = vmatpush1.msra.mxu0 0.0
    %1125 = vmatprep.subr.mxu0 0.0
    %1126 = vmatpush1.msra.mxu0 0.0
    %1127 = vmatprep.subr.mxu0 0.0
    %1128 = vmatpush1.msra.mxu0 0.0
    %1129 = vmatprep.subr.mxu0 0.0
    %1130 = vmatpush1.msra.mxu0 0.0
    %1131 = vmatprep.subr.mxu0 0.0
    %1132 = vmatpush1.msra.mxu0 0.0
    %1133 = vmatprep.subr.mxu0 0.0
    %1134 = vmatpush1.msra.mxu0 0.0
    %1135 = vmatprep.subr.mxu0 0.0
    %1136 = vmatpush1.msra.mxu0 0.0
    %1137 = vmatprep.subr.mxu0 0.0
    %1138 = vmatpush1.msra.mxu0 0.0
    %1139 = vmatprep.subr.mxu0 0.0
    %1140 = vmatpush1.msra.mxu0 0.0
    %1141 = vmatprep.subr.mxu0 0.0
    %1142 = vmatpush1.msra.mxu0 0.0
    %1143 = vmatprep.subr.mxu0 0.0
    %1144 = vmatpush1.msra.mxu0 0.0
    %1145 = vmatprep.subr.mxu0 0.0
    %1146 = vmatpush1.msra.mxu0 0.0
    %1147 = vmatprep.subr.mxu0 0.0
    %1148 = vmatpush1.msra.mxu0 0.0
    %1149 = vmatprep.subr.mxu0 0.0
    %1150 = vmatpush1.msra.mxu0 0.0
    %1151 = vmatprep.subr.mxu0 0.0
    %1152 = vmatpush1.msra.mxu0 0.0
    %1153 = vmatprep.subr.mxu0 0.0
    %1154 = vmatpush1.msra.mxu0 0.0
    %1155 = vmatprep.subr.mxu0 0.0
    %1156 = vmatpush1.msra.mxu0 0.0
    %1157 = vmatprep.subr.mxu0 0.0
    %1158 = vmatpush1.msra.mxu0 0.0
    %1159 = vmatprep.subr.mxu0 0.0
    %1160 = vmatpush1.msra.mxu0 0.0
    %1161 = vmatprep.subr.mxu0 0.0
    %1162 = vmatpush1.msra.mxu0 0.0
    %1163 = vmatprep.subr.mxu0 0.0
    %1164 = vmatpush1.msra.mxu0 0.0
    %1165 = vmatprep.mubr.f32.mxu0 0.0
    %1166 = vmatmul.mubr.f32.gmra.mrb[0].mxu0 %v1090
    %v1167 = vpop.f32.mrb[0].mxu0
    %v1168 = vadd.f32 %v1087, %v1167
    %v1169 = vpop.f32.mrb[0].mxu0
    %1170 = vmatprep.mubr.f32.mxu0 0.0
    %1171 = vmatmul.mubr.f32.gmra.mrb[0].mxu0 %v1093
    %v1172 = vpop.f32.mrb[0].mxu0
    %v1173 = vadd.f32 %v1087, %v1172
    %v1174 = vpop.f32.mrb[0].mxu0
    %1175 = vmatprep.mubr.f32.mxu0 0.0
    %1176 = vmatmul.mubr.f32.gmra.mrb[0].mxu0 %v1096
    %v1177 = vpop.f32.mrb[0].mxu0
    %v1178 = vadd.f32 %v1087, %v1177
    %v1179 = vpop.f32.mrb[0].mxu0
    %1180 = vmatprep.mubr.f32.mxu0 0.0
    %1181 = vmatmul.mubr.f32.gmra.mrb[0].mxu0 %v1099
    %v1182 = vpop.f32.mrb[0].mxu0
    %v1183 = vadd.f32 %v1087, %v1182
    %v1184 = vpop.f32.mrb[0].mxu0
    %1185 = vdwg.mxu0
    %1186 = vst.msk [vmem:[#allocation16] sm:$0xff] %vm152, %v1168
    %1187 = vst.msk [vmem:[#allocation16 + $0x8] sm:$0xff] %vm152, %v1173
    %1188 = vst.msk [vmem:[#allocation16 + $0x10] sm:$0xff] %vm152, %v1178
    %1189 = vst.msk [vmem:[#allocation16 + $0x18] sm:$0xff] %vm152, %v1183
    // Predicated region
    $region66: #{tpu_custom_call.1} parent=1 // pred_check
      _
    $region67: #{tpu_custom_call.1} parent=1 // pred_check_branch
      %1191 = sbr.rel (0) target = $region69
    $region68: #{tpu_custom_call.1} parent=1 // pred_region
      %s1193 = ssub.s32 512, 512
      %1194 = vsyncadd [#allocation4], %s1193
      %s1195 = sshll.u32 [#allocation16], 4
      %s1196 = int_to_ptr.vmem [resolvable:$true] %s1195
      %1201 = dma.vmem_to_hbm [thread:$0]  %s1196, 512, %s8, [#allocation4], 128, 128, 8
    $region69: #{tpu_custom_call.1} parent=1 // pred_fallthru
      _
    // Predicated region
    $region70: #{tpu_custom_call.1} parent=1 // pred_check
      _
    $region71: #{tpu_custom_call.1} parent=1 // pred_check_branch
      %1203 = sbr.rel (0) target = $region73
    $region72: #{tpu_custom_call.1} parent=1 // pred_region
      %1204 = dma.done [#allocation4], 512
    $region73: #{tpu_custom_call.1} parent=1 // pred_fallthru
      _
    %1205 = vsyncpa [#allocation3], 1
    %1206 = vsyncpa [#allocation6], 1
    %1207 = vsyncpa [#allocation9], 1
    %1208 = vsyncpa [#allocation12], 1
    %1209 = vsyncpa [#allocation15], 1
    %1210 = vsyncpa [#allocation4], 1

</llo_original>
